<compile_context>
chip_gen: v7x
topology: tpu7x:2x2x1
jax: 0.10.0
libtpu: 0.0.40
codegen_flags: <defaults>
</compile_context>

<pallas_src>
import functools

import jax
import jax.numpy as jnp
from jax import lax
from jax.experimental import pallas as pl
from jax.experimental.pallas import tpu as pltpu

ALPHA = 0.2            # LeakyReLU negative slope of GATLayer
V = 1.0                # Student-t degrees of freedom (DAEGC v=1)
NEG_MASK = -9e15       # masking constant used by the reference implementation
# TODO(synk): the sentinel encoding assumes M >= 0, which holds for DAEGC's
# t-order proximity matrix (get_M builds it from non-negative transition mats).
EDGE_SENTINEL = -1.0   # marks non-edges inside the fused adj/M array
VMEM_LIMIT = 32 * 1024 * 1024   # safe on v5e/v6e/v7x; tiles stay well below it


# ------------------------------ tiling helpers ------------------------------
def _pick_tile(n, pref, align):
    """Largest multiple of `align` that divides n, capped at `pref`; else full dim."""
    if n <= pref or n % align != 0:
        return n
    t = (pref // align) * align
    while t >= align:
        if n % t == 0:
            return t
        t -= align
    return n


# --------------------------- stage A: projection -----------------------------
def _project_kernel(x_ref, wplus_ref, h_ref, fs_ref, fnr_ref, *, dout):
    # Single fused matmul: [W | W@a_self | W@a_neigh] folded in the wrapper.
    h_ext = jnp.dot(x_ref[...], wplus_ref[...], preferred_element_type=jnp.float32)
    h_ref[...] = h_ext[:, :dout].astype(h_ref.dtype)           # bf16 projected features
    fs_ref[...] = h_ext[:, dout:dout + 1]                      # self scores   (TR, 1)
    # neighbor scores stored lane-oriented so stage B never transposes NxN data
    fnr_ref[...] = h_ext[:, dout + 1:dout + 2].T               # (1, TR)


def _project(x, wplus, dout, tr):
    n, din = x.shape
    wcols = wplus.shape[1]
    kernel = functools.partial(_project_kernel, dout=dout)
    return pl.pallas_call(
        kernel,
        grid=(n // tr,),
        in_specs=[pl.BlockSpec((tr, din), lambda i: (i, 0)),
                  pl.BlockSpec((din, wcols), lambda i: (0, 0))],
        out_specs=(pl.BlockSpec((tr, dout), lambda i: (i, 0)),
                   pl.BlockSpec((tr, 1), lambda i: (i, 0)),
                   pl.BlockSpec((1, tr), lambda i: (0, i))),
        out_shape=(jax.ShapeDtypeStruct((n, dout), jnp.bfloat16),  # h (bf16: MXU-native)
                   jax.ShapeDtypeStruct((n, 1), jnp.float32),      # f_self
                   jax.ShapeDtypeStruct((1, n), jnp.float32)),     # f_neigh (lane-oriented)
        compiler_params=pltpu.CompilerParams(
            dimension_semantics=("parallel",),
            vmem_limit_bytes=VMEM_LIMIT),
    )(x, wplus)


# --------------------- stage B: masked attention aggregate -------------------
def _attend(adjm, fs_ref, fnr_ref, h_ref, o_ref, m_sc, l_sc, acc_sc, normalize):
    """Shared online-softmax body. `adjm` holds M at edges, EDGE_SENTINEL (<0) else."""
    j = pl.program_id(1)

    @pl.when(j == 0)
    def _():
        m_sc[...] = jnp.full_like(m_sc, -jnp.inf)
        l_sc[...] = jnp.zeros_like(l_sc)
        acc_sc[...] = jnp.zeros_like(acc_sc)

    # attention logits for this (row-block, col-block) tile
    s = fs_ref[...] + fnr_ref[...]                         # (TR,1)+(1,TC) -> (TR,TC)
    s = s * adjm
    s = jnp.where(s > 0, s, ALPHA * s)                     # LeakyReLU(0.2)
    s = jnp.where(adjm >= 0.0, s, jnp.float32(NEG_MASK))   # non-edge mask

    # online softmax: never materialize the full NxN attention matrix
    m_new = jnp.maximum(m_sc[...], jnp.max(s, axis=1, keepdims=True))
    a = jnp.exp(m_sc[...] - m_new)
    p = jnp.exp(s - m_new)
    l_sc[...] = a * l_sc[...] + jnp.sum(p, axis=1, keepdims=True)
    acc_sc[...] = a * acc_sc[...] + jnp.dot(
        p.astype(jnp.bfloat16), h_ref[...], preferred_element_type=jnp.float32)
    m_sc[...] = m_new

    @pl.when(j == pl.num_programs(1) - 1)
    def _():
        hp = acc_sc[...] * pl.reciprocal(l_sc[...], approx=True)    # EUP, no divide
        # ELU(alpha=1); exp(min(hp,0)) keeps the unselected lane finite.
        hp = jnp.where(hp > 0, hp, jnp.exp(jnp.minimum(hp, 0.0)) - 1.0)
        if normalize:
            # F.normalize(p=2, dim=1): h / max(||row||, 1e-12) == h*rsqrt(max(ssq,1e-24))
            ssq = jnp.sum(hp * hp, axis=1, keepdims=True)
            hp = hp * lax.rsqrt(jnp.maximum(ssq, jnp.float32(1e-24)))
        o_ref[...] = hp


def _aggregate_fuse_kernel(fs_ref, fnr_ref, h_ref, adj_ref, m_ref, o_ref, adjm_ref,
                           m_sc, l_sc, acc_sc, *, normalize):
    # Layer-1 variant: build the fused adj/M array on the fly and persist it so
    # later layers stream a single NxN array.
    adjm = jnp.where(adj_ref[...] > 0, m_ref[...], jnp.float32(EDGE_SENTINEL))
    adjm_ref[...] = adjm
    _attend(adjm, fs_ref, fnr_ref, h_ref, o_ref, m_sc, l_sc, acc_sc, normalize)


def _aggregate_kernel(fs_ref, fnr_ref, h_ref, adjm_ref, o_ref,
                      m_sc, l_sc, acc_sc, *, normalize):
    _attend(adjm_ref[...], fs_ref, fnr_ref, h_ref, o_ref, m_sc, l_sc, acc_sc, normalize)


def _aggregate_first(fs, fnr, h, adj, M, *, normalize, tr, tc):
    n, dout = h.shape
    kernel = functools.partial(_aggregate_fuse_kernel, normalize=normalize)
    return pl.pallas_call(
        kernel,
        grid=(n // tr, n // tc),                 # reduction (column) axis last
        in_specs=[pl.BlockSpec((tr, 1), lambda i, j: (i, 0)),
                  pl.BlockSpec((1, tc), lambda i, j: (0, j)),
                  pl.BlockSpec((tc, dout), lambda i, j: (j, 0)),
                  pl.BlockSpec((tr, tc), lambda i, j: (i, j)),
                  pl.BlockSpec((tr, tc), lambda i, j: (i, j))],
        out_specs=(pl.BlockSpec((tr, dout), lambda i, j: (i, 0)),
                   pl.BlockSpec((tr, tc), lambda i, j: (i, j))),
        out_shape=(jax.ShapeDtypeStruct((n, dout), jnp.float32),   # h'
                   jax.ShapeDtypeStruct((n, n), jnp.float32)),     # fused adj/M
        scratch_shapes=[pltpu.VMEM((tr, 1), jnp.float32),      # running max
                        pltpu.VMEM((tr, 1), jnp.float32),      # running sum
                        pltpu.VMEM((tr, dout), jnp.float32)],  # accumulator
        compiler_params=pltpu.CompilerParams(
            dimension_semantics=("parallel", "arbitrary"),
            vmem_limit_bytes=VMEM_LIMIT),
    )(fs, fnr, h, adj, M)


def _aggregate(fs, fnr, h, adjm, *, normalize, tr, tc):
    n, dout = h.shape
    kernel = functools.partial(_aggregate_kernel, normalize=normalize)
    return pl.pallas_call(
        kernel,
        grid=(n // tr, n // tc),
        in_specs=[pl.BlockSpec((tr, 1), lambda i, j: (i, 0)),
                  pl.BlockSpec((1, tc), lambda i, j: (0, j)),
                  pl.BlockSpec((tc, dout), lambda i, j: (j, 0)),
                  pl.BlockSpec((tr, tc), lambda i, j: (i, j))],
        out_specs=pl.BlockSpec((tr, dout), lambda i, j: (i, 0)),
        out_shape=jax.ShapeDtypeStruct((n, dout), jnp.float32),
        scratch_shapes=[pltpu.VMEM((tr, 1), jnp.float32),
                        pltpu.VMEM((tr, 1), jnp.float32),
                        pltpu.VMEM((tr, dout), jnp.float32)],
        compiler_params=pltpu.CompilerParams(
            dimension_semantics=("parallel", "arbitrary"),
            vmem_limit_bytes=VMEM_LIMIT),
    )(fs, fnr, h, adjm)


def _wplus(W, a_self, a_neigh):
    # Fold the two attention projections into the feature projection (wrapper-side).
    return jnp.concatenate([W, W @ a_self, W @ a_neigh], axis=1)


def _gat_layer_first(h_in, adj, M, W, a_self, a_neigh, *, normalize, tr, tc):
    dout = W.shape[1]
    h, fs, fnr = _project(h_in, _wplus(W, a_self, a_neigh), dout, tr)
    return _aggregate_first(fs, fnr, h, adj, M, normalize=normalize, tr=tr, tc=tc)


def _gat_layer(h_in, adjm, W, a_self, a_neigh, *, normalize, tr, tc):
    dout = W.shape[1]
    h, fs, fnr = _project(h_in, _wplus(W, a_self, a_neigh), dout, tr)
    return _aggregate(fs, fnr, h, adjm, normalize=normalize, tr=tr, tc=tc)


# ------------------- stage C: dot-product decode + Student-t q ---------------
def _decode_kernel(zi_ref, zj_ref, clu_ref, apred_ref, q_ref):
    zi = zi_ref[...]
    # sigmoid(z @ z^T): bf16 MXU matmul contracted on the feature (lane) dim,
    # sigmoid expressed via tanh (EUP) -> no per-element divide.
    logits = lax.dot_general(zi.astype(jnp.bfloat16), zj_ref[...].astype(jnp.bfloat16),
                             (((1,), (1,)), ((), ())),
                             preferred_element_type=jnp.float32)
    apred_ref[...] = 0.5 * jnp.tanh(0.5 * logits) + 0.5

    @pl.when(pl.program_id(1) == 0)
    def _():
        # d2 = ||z||^2 + ||c||^2 - 2 z@c^T  (MXU form, no (N,K,E) temporary)
        clu = clu_ref[...]
        zc = lax.dot_general(zi, clu, (((1,), (1,)), ((), ())),
                             preferred_element_type=jnp.float32)      # (TR, K)
        z2 = jnp.sum(zi * zi, axis=1, keepdims=True)
        c2 = jnp.sum(clu * clu, axis=1, keepdims=True)                # (K, 1)
        d2 = jnp.maximum(z2 + c2.T - 2.0 * zc, 0.0)
        qv = pl.reciprocal(1.0 + d2 * (1.0 / V), approx=True)
        qv = qv * jnp.sqrt(qv)   # q ** ((V+2)/2) with V=1 -> q**1.5 (TODO(synk): general v needs pow)
        q_ref[...] = qv * pl.reciprocal(jnp.sum(qv, axis=1, keepdims=True), approx=True)


def _decode_and_q(z, clusters, *, tr, tc):
    n, e = z.shape
    k = clusters.shape[0]
    return pl.pallas_call(
        _decode_kernel,
        grid=(n // tr, n // tc),
        in_specs=[pl.BlockSpec((tr, e), lambda i, j: (i, 0)),
                  pl.BlockSpec((tc, e), lambda i, j: (j, 0)),
                  pl.BlockSpec((k, e), lambda i, j: (0, 0))],
        out_specs=(pl.BlockSpec((tr, tc), lambda i, j: (i, j)),   # lane-dense A_pred tiles
                   pl.BlockSpec((tr, k), lambda i, j: (i, 0))),
        out_shape=(jax.ShapeDtypeStruct((n, n), jnp.float32),
                   jax.ShapeDtypeStruct((n, k), jnp.float32)),
        compiler_params=pltpu.CompilerParams(
            dimension_semantics=("parallel", "arbitrary"),
            vmem_limit_bytes=VMEM_LIMIT),
    )(z, z, clusters)


# ---------------------------------- forward ----------------------------------
def daegc_forward(x, adj_norm, M, params):
    n = x.shape[0]
    tr = _pick_tile(n, 256, 8)     # row (sublane) tile
    tc = _pick_tile(n, 512, 128)   # streamed adj/M/A_pred column (lane) tile

    # GAT = two GATLayers + row L2 normalize (its own dot-product decode is
    # discarded by DAEGC.forward, so it is not computed).  Layer 1 also emits
    # the fused adj/M array reused by layers 2 and 3.
    h1, adjm = _gat_layer_first(x, adj_norm, M,
                                params["W1"], params["a1_self"], params["a1_neigh"],
                                normalize=False, tr=tr, tc=tc)
    z_gat = _gat_layer(h1, adjm,
                       params["W2"], params["a2_self"], params["a2_neigh"],
                       normalize=True, tr=tr, tc=tc)
    # gat_layer1 on top of z, then L2 normalize again.
    z = _gat_layer(z_gat, adjm,
                   params["W3"], params["a3_self"], params["a3_neigh"],
                   normalize=True, tr=tr, tc=tc)
    # A_pred = sigmoid(z z^T); q = Student-t soft assignment against cluster centers.
    a_pred, q = _decode_and_q(z, params["cluster"], tr=tr, tc=tc)
    return a_pred, z, q


# ------------------------- pure-JAX reference (check) ------------------------
def _ref_forward(x, adj, M, p):
    def layer(h_in, W, a_s, a_n):
        h = h_in @ W
        attn = (h @ a_s) + (h @ a_n).T
        attn = attn * M
        attn = jnp.where(attn > 0, attn, ALPHA * attn)
        attn = jnp.where(adj > 0, attn, NEG_MASK)
        attn = jax.nn.softmax(attn, axis=1)
        hp = attn @ h
        return jnp.where(hp > 0, hp, jnp.exp(hp) - 1.0)

    def norm(h):
        nrm = jnp.sqrt(jnp.sum(h * h, axis=1, keepdims=True))
        return h / jnp.maximum(nrm, 1e-12)

    h1 = layer(x, p["W1"], p["a1_self"], p["a1_neigh"])
    h2 = layer(h1, p["W2"], p["a2_self"], p["a2_neigh"])
    z = norm(layer(norm(h2), p["W3"], p["a3_self"], p["a3_neigh"]))
    d2 = jnp.sum((z[:, None, :] - p["cluster"][None, :, :]) ** 2, axis=2)
    q = (1.0 / (1.0 + d2 / V)) ** ((V + 2.0) / 2.0)
    q = q / jnp.sum(q, axis=1, keepdims=True)
    return jax.nn.sigmoid(z @ z.T), z, q


# ----------------------------------- main ------------------------------------
if __name__ == "__main__":
    N, F, H, E, K = 32, 16, 32, 16, 4   # nodes, num_features, hidden, embedding, clusters

    key = jax.random.PRNGKey(0)
    ks = jax.random.split(key, 12)

    x = jax.random.normal(ks[0], (N, F), jnp.float32)

    # Symmetric random graph with self-loops; adj_norm = row-normalized adjacency.
    a = jax.random.uniform(ks[1], (N, N)) < 0.3
    adj = jnp.asarray(a | a.T | jnp.eye(N, dtype=bool), jnp.float32)
    adj_norm = adj / jnp.sum(adj, axis=1, keepdims=True)
    M = adj_norm @ adj_norm      # 2-hop proximity matrix (DAEGC's get_M with t=2)

    def init(k, shape, fan_in):
        return (jax.random.normal(k, shape, jnp.float32) *
                jnp.sqrt(2.0 / fan_in)).astype(jnp.float32)

    params = {
        "W1": init(ks[2], (F, H), F), "a1_self": init(ks[3], (H, 1), H),
        "a1_neigh": init(ks[4], (H, 1), H),
        "W2": init(ks[5], (H, E), H), "a2_self": init(ks[6], (E, 1), E),
        "a2_neigh": init(ks[7], (E, 1), E),
        "W3": init(ks[8], (E, E), E), "a3_self": init(ks[9], (E, 1), E),
        "a3_neigh": init(ks[10], (E, 1), E),
        "cluster": init(ks[11], (K, E), E),
    }

    fwd = jax.jit(daegc_forward)
    A_pred, z, q = jax.block_until_ready(fwd(x, adj_norm, M, params))

    # correctness check against pure-f32 JAX reference (kernel uses bf16 MXU
    # inputs and EUP approximate reciprocals -> slightly loosened tolerances)
    A_ref, z_ref, q_ref = _ref_forward(x, adj_norm, M, params)
    assert A_pred.shape == (N, N) and z.shape == (N, E) and q.shape == (N, K)
    assert jnp.allclose(A_pred, A_ref, atol=1e-2, rtol=2e-2)
    assert jnp.allclose(z, z_ref, atol=1e-2, rtol=2e-2)
    assert jnp.allclose(q, q_ref, atol=1e-2, rtol=2e-2)

    print("KERNEL_OK")
</pallas_src>

<mosaic_0001>
module attributes {stable_mosaic.version = 11 : i64} {
  func.func @_aggregate_fuse_kernel(%arg0: i32, %arg1: i32, %arg2: memref<32x1xf32, #tpu.memory_space<vmem>>, %arg3: memref<1x32xf32, #tpu.memory_space<vmem>>, %arg4: memref<32x32xbf16, #tpu.memory_space<vmem>>, %arg5: memref<32x32xf32, #tpu.memory_space<vmem>>, %arg6: memref<32x32xf32, #tpu.memory_space<vmem>>, %arg7: memref<32x32xf32, #tpu.memory_space<vmem>>, %arg8: memref<32x32xf32, #tpu.memory_space<vmem>>, %arg9: memref<32x1xf32, #tpu.memory_space<vmem>>, %arg10: memref<32x1xf32, #tpu.memory_space<vmem>>, %arg11: memref<32x32xf32, #tpu.memory_space<vmem>>) attributes {dimension_semantics = [#tpu.dimension_semantics<parallel>, #tpu.dimension_semantics<arbitrary>], iteration_bounds = array<i64: 1, 1>, scalar_prefetch = 0 : i64, scratch_operands = 3 : i64, tpu.core_type = #tpu.core_type<tc>, window_params = [{transform_indices = @transform_0, window_bounds = array<i64: 32, 1>}, {transform_indices = @transform_1, window_bounds = array<i64: 1, 32>}, {transform_indices = @transform_2, window_bounds = array<i64: 32, 32>}, {transform_indices = @transform_3, window_bounds = array<i64: 32, 32>}, {transform_indices = @transform_4, window_bounds = array<i64: 32, 32>}, {transform_indices = @transform_5, window_bounds = array<i64: 32, 32>}, {transform_indices = @transform_6, window_bounds = array<i64: 32, 32>}]} {
    %c0 = arith.constant 0 : index
    %c0_0 = arith.constant 0 : index
    %0 = vector.load %arg5[%c0, %c0_0] : memref<32x32xf32, #tpu.memory_space<vmem>>, vector<32x32xf32>
    %cst = arith.constant 0.000000e+00 : f32
    %1 = vector.broadcast %cst : f32 to vector<32x32xf32>
    %2 = arith.cmpf ogt, %0, %1 : vector<32x32xf32>
    %c0_1 = arith.constant 0 : index
    %c0_2 = arith.constant 0 : index
    %3 = vector.load %arg6[%c0_1, %c0_2] : memref<32x32xf32, #tpu.memory_space<vmem>>, vector<32x32xf32>
    %cst_3 = arith.constant -1.000000e+00 : f32
    %4 = vector.broadcast %cst_3 : f32 to vector<32x32xf32>
    %5 = arith.select %2, %3, %4 : vector<32x32xi1>, vector<32x32xf32>
    %c0_4 = arith.constant 0 : index
    %c0_5 = arith.constant 0 : index
    %6 = vector.load %arg8[%c0_4, %c0_5] : memref<32x32xf32, #tpu.memory_space<vmem>>, vector<32x32xf32>
    tpu.vector_store %arg8[%c0_4, %c0_5], %5 {strides = array<i32>} : memref<32x32xf32, #tpu.memory_space<vmem>>, vector<32x32xf32>,
    %c0_i32 = arith.constant 0 : i32
    %7 = arith.cmpi eq, %arg1, %c0_i32 : i32
    %8 = arith.extui %7 : i1 to i32
    %c0_i32_6 = arith.constant 0 : i32
    %9 = arith.cmpi ne, %8, %c0_i32_6 : i32
    scf.if %9 {
      %cst_36 = arith.constant 0xFF800000 : f32
      %53 = vector.broadcast %cst_36 : f32 to vector<32x1xf32>
      %c0_37 = arith.constant 0 : index
      %c0_38 = arith.constant 0 : index
      %54 = vector.load %arg9[%c0_37, %c0_38] : memref<32x1xf32, #tpu.memory_space<vmem>>, vector<32x1xf32>
      tpu.vector_store %arg9[%c0_37, %c0_38], %53 {strides = array<i32>} : memref<32x1xf32, #tpu.memory_space<vmem>>, vector<32x1xf32>,
      %cst_39 = arith.constant 0.000000e+00 : f32
      %55 = vector.broadcast %cst_39 : f32 to vector<32x1xf32>
      %c0_40 = arith.constant 0 : index
      %c0_41 = arith.constant 0 : index
      %56 = vector.load %arg10[%c0_40, %c0_41] : memref<32x1xf32, #tpu.memory_space<vmem>>, vector<32x1xf32>
      tpu.vector_store %arg10[%c0_40, %c0_41], %55 {strides = array<i32>} : memref<32x1xf32, #tpu.memory_space<vmem>>, vector<32x1xf32>,
      %cst_42 = arith.constant 0.000000e+00 : f32
      %57 = vector.broadcast %cst_42 : f32 to vector<32x32xf32>
      %c0_43 = arith.constant 0 : index
      %c0_44 = arith.constant 0 : index
      %58 = vector.load %arg11[%c0_43, %c0_44] : memref<32x32xf32, #tpu.memory_space<vmem>>, vector<32x32xf32>
      tpu.vector_store %arg11[%c0_43, %c0_44], %57 {strides = array<i32>} : memref<32x32xf32, #tpu.memory_space<vmem>>, vector<32x32xf32>,
    } else {
    }
    %c0_7 = arith.constant 0 : index
    %c0_8 = arith.constant 0 : index
    %10 = vector.load %arg2[%c0_7, %c0_8] : memref<32x1xf32, #tpu.memory_space<vmem>>, vector<32x1xf32>
    %c0_9 = arith.constant 0 : index
    %c0_10 = arith.constant 0 : index
    %11 = vector.load %arg3[%c0_9, %c0_10] : memref<1x32xf32, #tpu.memory_space<vmem>>, vector<1x32xf32>
    %12 = vector.broadcast %10 : vector<32x1xf32> to vector<32x32xf32>
    %13 = vector.broadcast %11 : vector<1x32xf32> to vector<32x32xf32>
    %14 = arith.addf %12, %13 : vector<32x32xf32>
    %15 = arith.mulf %14, %5 : vector<32x32xf32>
    %cst_11 = arith.constant 0.000000e+00 : f32
    %16 = vector.broadcast %cst_11 : f32 to vector<32x32xf32>
    %17 = arith.cmpf ogt, %15, %16 : vector<32x32xf32>
    %cst_12 = arith.constant 2.000000e-01 : f32
    %18 = vector.broadcast %cst_12 : f32 to vector<32x32xf32>
    %19 = arith.mulf %18, %15 : vector<32x32xf32>
    %20 = arith.select %17, %15, %19 : vector<32x32xi1>, vector<32x32xf32>
    %cst_13 = arith.constant 0.000000e+00 : f32
    %21 = vector.broadcast %cst_13 : f32 to vector<32x32xf32>
    %22 = arith.cmpf oge, %5, %21 : vector<32x32xf32>
    %cst_14 = arith.constant -9.000000e+15 : f32
    %23 = vector.broadcast %cst_14 : f32 to vector<32x32xf32>
    %24 = arith.select %22, %20, %23 : vector<32x32xi1>, vector<32x32xf32>
    %c0_15 = arith.constant 0 : index
    %c0_16 = arith.constant 0 : index
    %25 = vector.load %arg9[%c0_15, %c0_16] : memref<32x1xf32, #tpu.memory_space<vmem>>, vector<32x1xf32>
    %cst_17 = arith.constant dense<0xFF800000> : vector<32xf32>
    %26 = vector.multi_reduction <maximumf>, %24, %cst_17 [1] : vector<32x32xf32> to vector<32xf32>
    %27 = vector.shape_cast %26 : vector<32xf32> to vector<32x1xf32>
    %28 = arith.maximumf %25, %27 : vector<32x1xf32>
    %c0_18 = arith.constant 0 : index
    %c0_19 = arith.constant 0 : index
    %29 = vector.load %arg9[%c0_18, %c0_19] : memref<32x1xf32, #tpu.memory_space<vmem>>, vector<32x1xf32>
    %30 = arith.subf %29, %28 : vector<32x1xf32>
    %31 = math.exp %30 : vector<32x1xf32>
    %32 = vector.broadcast %28 : vector<32x1xf32> to vector<32x32xf32>
    %33 = arith.subf %24, %32 : vector<32x32xf32>
    %34 = math.exp %33 : vector<32x32xf32>
    %c0_20 = arith.constant 0 : index
    %c0_21 = arith.constant 0 : index
    %35 = vector.load %arg10[%c0_20, %c0_21] : memref<32x1xf32, #tpu.memory_space<vmem>>, vector<32x1xf32>
    %36 = arith.mulf %31, %35 : vector<32x1xf32>
    %cst_22 = arith.constant dense<0.000000e+00> : vector<32xf32>
    %37 = vector.multi_reduction <add>, %34, %cst_22 [1] : vector<32x32xf32> to vector<32xf32>
    %38 = vector.shape_cast %37 : vector<32xf32> to vector<32x1xf32>
    %39 = arith.addf %36, %38 : vector<32x1xf32>
    %c0_23 = arith.constant 0 : index
    %c0_24 = arith.constant 0 : index
    %40 = vector.load %arg10[%c0_23, %c0_24] : memref<32x1xf32, #tpu.memory_space<vmem>>, vector<32x1xf32>
    tpu.vector_store %arg10[%c0_23, %c0_24], %39 {strides = array<i32>} : memref<32x1xf32, #tpu.memory_space<vmem>>, vector<32x1xf32>,
    %c0_25 = arith.constant 0 : index
    %c0_26 = arith.constant 0 : index
    %41 = vector.load %arg11[%c0_25, %c0_26] : memref<32x32xf32, #tpu.memory_space<vmem>>, vector<32x32xf32>
    %42 = vector.broadcast %31 : vector<32x1xf32> to vector<32x32xf32>
    %43 = arith.mulf %42, %41 : vector<32x32xf32>
    %44 = arith.truncf %34 : vector<32x32xf32> to vector<32x32xbf16>
    %c0_27 = arith.constant 0 : index
    %c0_28 = arith.constant 0 : index
    %45 = vector.load %arg4[%c0_27, %c0_28] : memref<32x32xbf16, #tpu.memory_space<vmem>>, vector<32x32xbf16>
    %cst_29 = arith.constant dense<0.000000e+00> : vector<32x32xf32>
    %46 = tpu.matmul %44, %45, %cst_29 {dimension_numbers = #tpu.dot_dimension_numbers<[1], [0], [0], [1], [0, 0, 1, 1], [], []>} : vector<32x32xbf16>, vector<32x32xbf16>, vector<32x32xf32> -> vector<32x32xf32>
    %47 = arith.addf %43, %46 : vector<32x32xf32>
    %c0_30 = arith.constant 0 : index
    %c0_31 = arith.constant 0 : index
    %48 = vector.load %arg11[%c0_30, %c0_31] : memref<32x32xf32, #tpu.memory_space<vmem>>, vector<32x32xf32>
    tpu.vector_store %arg11[%c0_30, %c0_31], %47 {strides = array<i32>} : memref<32x32xf32, #tpu.memory_space<vmem>>, vector<32x32xf32>,
    %c0_32 = arith.constant 0 : index
    %c0_33 = arith.constant 0 : index
    %49 = vector.load %arg9[%c0_32, %c0_33] : memref<32x1xf32, #tpu.memory_space<vmem>>, vector<32x1xf32>
    tpu.vector_store %arg9[%c0_32, %c0_33], %28 {strides = array<i32>} : memref<32x1xf32, #tpu.memory_space<vmem>>, vector<32x1xf32>,
    %c0_i32_34 = arith.constant 0 : i32
    %50 = arith.cmpi eq, %arg1, %c0_i32_34 : i32
    %51 = arith.extui %50 : i1 to i32
    %c0_i32_35 = arith.constant 0 : i32
    %52 = arith.cmpi ne, %51, %c0_i32_35 : i32
    scf.if %52 {
      %c0_36 = arith.constant 0 : index
      %c0_37 = arith.constant 0 : index
      %53 = vector.load %arg11[%c0_36, %c0_37] : memref<32x32xf32, #tpu.memory_space<vmem>>, vector<32x32xf32>
      %c0_38 = arith.constant 0 : index
      %c0_39 = arith.constant 0 : index
      %54 = vector.load %arg10[%c0_38, %c0_39] : memref<32x1xf32, #tpu.memory_space<vmem>>, vector<32x1xf32>
      %55 = tpu.reciprocal %54 {approx = true} : vector<32x1xf32> -> vector<32x1xf32>
      %56 = vector.broadcast %55 : vector<32x1xf32> to vector<32x32xf32>
      %57 = arith.mulf %53, %56 : vector<32x32xf32>
      %cst_40 = arith.constant 0.000000e+00 : f32
      %58 = vector.broadcast %cst_40 : f32 to vector<32x32xf32>
      %59 = arith.cmpf ogt, %57, %58 : vector<32x32xf32>
      %cst_41 = arith.constant 0.000000e+00 : f32
      %60 = vector.broadcast %cst_41 : f32 to vector<32x32xf32>
      %61 = arith.minimumf %57, %60 : vector<32x32xf32>
      %62 = math.exp %61 : vector<32x32xf32>
      %cst_42 = arith.constant 1.000000e+00 : f32
      %63 = vector.broadcast %cst_42 : f32 to vector<32x32xf32>
      %64 = arith.subf %62, %63 : vector<32x32xf32>
      %65 = arith.select %59, %57, %64 : vector<32x32xi1>, vector<32x32xf32>
      %c0_43 = arith.constant 0 : index
      %c0_44 = arith.constant 0 : index
      %66 = vector.load %arg7[%c0_43, %c0_44] : memref<32x32xf32, #tpu.memory_space<vmem>>, vector<32x32xf32>
      tpu.vector_store %arg7[%c0_43, %c0_44], %65 {strides = array<i32>} : memref<32x32xf32, #tpu.memory_space<vmem>>, vector<32x32xf32>,
    } else {
    }
    return
  }
  func.func @transform_0(%arg0: i32, %arg1: i32) -> (i32, i32) {
    %c0_i32 = arith.constant 0 : i32
    %c0_i32_0 = arith.constant 0 : i32
    return %arg0, %c0_i32 : i32, i32
  }
  func.func @transform_1(%arg0: i32, %arg1: i32) -> (i32, i32) {
    %c0_i32 = arith.constant 0 : i32
    %c0_i32_0 = arith.constant 0 : i32
    return %c0_i32, %arg1 : i32, i32
  }
  func.func @transform_2(%arg0: i32, %arg1: i32) -> (i32, i32) {
    %c0_i32 = arith.constant 0 : i32
    %c0_i32_0 = arith.constant 0 : i32
    return %arg1, %c0_i32 : i32, i32
  }
  func.func @transform_3(%arg0: i32, %arg1: i32) -> (i32, i32) {
    %c0_i32 = arith.constant 0 : i32
    return %arg0, %arg1 : i32, i32
  }
  func.func @transform_4(%arg0: i32, %arg1: i32) -> (i32, i32) {
    %c0_i32 = arith.constant 0 : i32
    return %arg0, %arg1 : i32, i32
  }
  func.func @transform_5(%arg0: i32, %arg1: i32) -> (i32, i32) {
    %c0_i32 = arith.constant 0 : i32
    %c0_i32_0 = arith.constant 0 : i32
    return %arg0, %c0_i32 : i32, i32
  }
  func.func @transform_6(%arg0: i32, %arg1: i32) -> (i32, i32) {
    %c0_i32 = arith.constant 0 : i32
    return %arg0, %arg1 : i32, i32
  }
}

module attributes {stable_mosaic.version = 11 : i64} {
  func.func @_project_kernel(%arg0: i32, %arg1: memref<32x32xf32, #tpu.memory_space<vmem>>, %arg2: memref<32x18xf32, #tpu.memory_space<vmem>>, %arg3: memref<32x16xbf16, #tpu.memory_space<vmem>>, %arg4: memref<32x1xf32, #tpu.memory_space<vmem>>, %arg5: memref<1x32xf32, #tpu.memory_space<vmem>>) attributes {dimension_semantics = [#tpu.dimension_semantics<parallel>], iteration_bounds = array<i64: 1>, scalar_prefetch = 0 : i64, scratch_operands = 0 : i64, tpu.core_type = #tpu.core_type<tc>, window_params = [{transform_indices = @transform_0, window_bounds = array<i64: 32, 32>}, {pipeline_mode = #tpu.pipeline_mode<synchronous>, transform_indices = @transform_1, window_bounds = array<i64: 32, 18>}, {transform_indices = @transform_2, window_bounds = array<i64: 32, 16>}, {transform_indices = @transform_3, window_bounds = array<i64: 32, 1>}, {transform_indices = @transform_4, window_bounds = array<i64: 1, 32>}]} {
    %c0 = arith.constant 0 : index
    %c0_0 = arith.constant 0 : index
    %0 = vector.load %arg1[%c0, %c0_0] : memref<32x32xf32, #tpu.memory_space<vmem>>, vector<32x32xf32>
    %c0_1 = arith.constant 0 : index
    %c0_2 = arith.constant 0 : index
    %1 = vector.load %arg2[%c0_1, %c0_2] : memref<32x18xf32, #tpu.memory_space<vmem>>, vector<32x18xf32>
    %cst = arith.constant dense<0.000000e+00> : vector<32x18xf32>
    %2 = tpu.matmul %0, %1, %cst {dimension_numbers = #tpu.dot_dimension_numbers<[1], [0], [0], [1], [0, 0, 1, 1], [], []>} : vector<32x32xf32>, vector<32x18xf32>, vector<32x18xf32> -> vector<32x18xf32>
    %3 = vector.extract_strided_slice %2 {offsets = [0, 0], sizes = [32, 16], strides = [1, 1]} : vector<32x18xf32> to vector<32x16xf32>
    %4 = arith.truncf %3 : vector<32x16xf32> to vector<32x16xbf16>
    %c0_3 = arith.constant 0 : index
    %c0_4 = arith.constant 0 : index
    %5 = vector.load %arg3[%c0_3, %c0_4] : memref<32x16xbf16, #tpu.memory_space<vmem>>, vector<32x16xbf16>
    tpu.vector_store %arg3[%c0_3, %c0_4], %4 {strides = array<i32>} : memref<32x16xbf16, #tpu.memory_space<vmem>>, vector<32x16xbf16>,
    %6 = vector.extract_strided_slice %2 {offsets = [0, 16], sizes = [32, 1], strides = [1, 1]} : vector<32x18xf32> to vector<32x1xf32>
    %c0_5 = arith.constant 0 : index
    %c0_6 = arith.constant 0 : index
    %7 = vector.load %arg4[%c0_5, %c0_6] : memref<32x1xf32, #tpu.memory_space<vmem>>, vector<32x1xf32>
    tpu.vector_store %arg4[%c0_5, %c0_6], %6 {strides = array<i32>} : memref<32x1xf32, #tpu.memory_space<vmem>>, vector<32x1xf32>,
    %8 = vector.extract_strided_slice %2 {offsets = [0, 17], sizes = [32, 1], strides = [1, 1]} : vector<32x18xf32> to vector<32x1xf32>
    %9 = tpu.transpose %8, [1, 0] : vector<32x1xf32> -> vector<1x32xf32>
    %c0_7 = arith.constant 0 : index
    %c0_8 = arith.constant 0 : index
    %10 = vector.load %arg5[%c0_7, %c0_8] : memref<1x32xf32, #tpu.memory_space<vmem>>, vector<1x32xf32>
    tpu.vector_store %arg5[%c0_7, %c0_8], %9 {strides = array<i32>} : memref<1x32xf32, #tpu.memory_space<vmem>>, vector<1x32xf32>,
    return
  }
  func.func @transform_0(%arg0: i32) -> (i32, i32) {
    %c0_i32 = arith.constant 0 : i32
    %c0_i32_0 = arith.constant 0 : i32
    return %arg0, %c0_i32 : i32, i32
  }
  func.func @transform_1(%arg0: i32) -> (i32, i32) {
    %c0_i32 = arith.constant 0 : i32
    %c0_i32_0 = arith.constant 0 : i32
    %c0_i32_1 = arith.constant 0 : i32
    return %c0_i32, %c0_i32_0 : i32, i32
  }
  func.func @transform_2(%arg0: i32) -> (i32, i32) {
    %c0_i32 = arith.constant 0 : i32
    %c0_i32_0 = arith.constant 0 : i32
    return %arg0, %c0_i32 : i32, i32
  }
  func.func @transform_3(%arg0: i32) -> (i32, i32) {
    %c0_i32 = arith.constant 0 : i32
    %c0_i32_0 = arith.constant 0 : i32
    return %arg0, %c0_i32 : i32, i32
  }
  func.func @transform_4(%arg0: i32) -> (i32, i32) {
    %c0_i32 = arith.constant 0 : i32
    %c0_i32_0 = arith.constant 0 : i32
    return %c0_i32, %arg0 : i32, i32
  }
}

module attributes {stable_mosaic.version = 11 : i64} {
  func.func @_project_kernel(%arg0: i32, %arg1: memref<32x16xf32, #tpu.memory_space<vmem>>, %arg2: memref<16x34xf32, #tpu.memory_space<vmem>>, %arg3: memref<32x32xbf16, #tpu.memory_space<vmem>>, %arg4: memref<32x1xf32, #tpu.memory_space<vmem>>, %arg5: memref<1x32xf32, #tpu.memory_space<vmem>>) attributes {dimension_semantics = [#tpu.dimension_semantics<parallel>], iteration_bounds = array<i64: 1>, scalar_prefetch = 0 : i64, scratch_operands = 0 : i64, tpu.core_type = #tpu.core_type<tc>, window_params = [{transform_indices = @transform_0, window_bounds = array<i64: 32, 16>}, {pipeline_mode = #tpu.pipeline_mode<synchronous>, transform_indices = @transform_1, window_bounds = array<i64: 16, 34>}, {transform_indices = @transform_2, window_bounds = array<i64: 32, 32>}, {transform_indices = @transform_3, window_bounds = array<i64: 32, 1>}, {transform_indices = @transform_4, window_bounds = array<i64: 1, 32>}]} {
    %c0 = arith.constant 0 : index
    %c0_0 = arith.constant 0 : index
    %0 = vector.load %arg1[%c0, %c0_0] : memref<32x16xf32, #tpu.memory_space<vmem>>, vector<32x16xf32>
    %c0_1 = arith.constant 0 : index
    %c0_2 = arith.constant 0 : index
    %1 = vector.load %arg2[%c0_1, %c0_2] : memref<16x34xf32, #tpu.memory_space<vmem>>, vector<16x34xf32>
    %cst = arith.constant dense<0.000000e+00> : vector<32x34xf32>
    %2 = tpu.matmul %0, %1, %cst {dimension_numbers = #tpu.dot_dimension_numbers<[1], [0], [0], [1], [0, 0, 1, 1], [], []>} : vector<32x16xf32>, vector<16x34xf32>, vector<32x34xf32> -> vector<32x34xf32>
    %3 = vector.extract_strided_slice %2 {offsets = [0, 0], sizes = [32, 32], strides = [1, 1]} : vector<32x34xf32> to vector<32x32xf32>
    %4 = arith.truncf %3 : vector<32x32xf32> to vector<32x32xbf16>
    %c0_3 = arith.constant 0 : index
    %c0_4 = arith.constant 0 : index
    %5 = vector.load %arg3[%c0_3, %c0_4] : memref<32x32xbf16, #tpu.memory_space<vmem>>, vector<32x32xbf16>
    tpu.vector_store %arg3[%c0_3, %c0_4], %4 {strides = array<i32>} : memref<32x32xbf16, #tpu.memory_space<vmem>>, vector<32x32xbf16>,
    %6 = vector.extract_strided_slice %2 {offsets = [0, 32], sizes = [32, 1], strides = [1, 1]} : vector<32x34xf32> to vector<32x1xf32>
    %c0_5 = arith.constant 0 : index
    %c0_6 = arith.constant 0 : index
    %7 = vector.load %arg4[%c0_5, %c0_6] : memref<32x1xf32, #tpu.memory_space<vmem>>, vector<32x1xf32>
    tpu.vector_store %arg4[%c0_5, %c0_6], %6 {strides = array<i32>} : memref<32x1xf32, #tpu.memory_space<vmem>>, vector<32x1xf32>,
    %8 = vector.extract_strided_slice %2 {offsets = [0, 33], sizes = [32, 1], strides = [1, 1]} : vector<32x34xf32> to vector<32x1xf32>
    %9 = tpu.transpose %8, [1, 0] : vector<32x1xf32> -> vector<1x32xf32>
    %c0_7 = arith.constant 0 : index
    %c0_8 = arith.constant 0 : index
    %10 = vector.load %arg5[%c0_7, %c0_8] : memref<1x32xf32, #tpu.memory_space<vmem>>, vector<1x32xf32>
    tpu.vector_store %arg5[%c0_7, %c0_8], %9 {strides = array<i32>} : memref<1x32xf32, #tpu.memory_space<vmem>>, vector<1x32xf32>,
    return
  }
  func.func @transform_0(%arg0: i32) -> (i32, i32) {
    %c0_i32 = arith.constant 0 : i32
    %c0_i32_0 = arith.constant 0 : i32
    return %arg0, %c0_i32 : i32, i32
  }
  func.func @transform_1(%arg0: i32) -> (i32, i32) {
    %c0_i32 = arith.constant 0 : i32
    %c0_i32_0 = arith.constant 0 : i32
    %c0_i32_1 = arith.constant 0 : i32
    return %c0_i32, %c0_i32_0 : i32, i32
  }
  func.func @transform_2(%arg0: i32) -> (i32, i32) {
    %c0_i32 = arith.constant 0 : i32
    %c0_i32_0 = arith.constant 0 : i32
    return %arg0, %c0_i32 : i32, i32
  }
  func.func @transform_3(%arg0: i32) -> (i32, i32) {
    %c0_i32 = arith.constant 0 : i32
    %c0_i32_0 = arith.constant 0 : i32
    return %arg0, %c0_i32 : i32, i32
  }
  func.func @transform_4(%arg0: i32) -> (i32, i32) {
    %c0_i32 = arith.constant 0 : i32
    %c0_i32_0 = arith.constant 0 : i32
    return %c0_i32, %arg0 : i32, i32
  }
}

module attributes {stable_mosaic.version = 11 : i64} {
  func.func @_aggregate_kernel(%arg0: i32, %arg1: i32, %arg2: memref<32x1xf32, #tpu.memory_space<vmem>>, %arg3: memref<1x32xf32, #tpu.memory_space<vmem>>, %arg4: memref<32x16xbf16, #tpu.memory_space<vmem>>, %arg5: memref<32x32xf32, #tpu.memory_space<vmem>>, %arg6: memref<32x16xf32, #tpu.memory_space<vmem>>, %arg7: memref<32x1xf32, #tpu.memory_space<vmem>>, %arg8: memref<32x1xf32, #tpu.memory_space<vmem>>, %arg9: memref<32x16xf32, #tpu.memory_space<vmem>>) attributes {dimension_semantics = [#tpu.dimension_semantics<parallel>, #tpu.dimension_semantics<arbitrary>], iteration_bounds = array<i64: 1, 1>, scalar_prefetch = 0 : i64, scratch_operands = 3 : i64, tpu.core_type = #tpu.core_type<tc>, window_params = [{transform_indices = @transform_0, window_bounds = array<i64: 32, 1>}, {transform_indices = @transform_1, window_bounds = array<i64: 1, 32>}, {transform_indices = @transform_2, window_bounds = array<i64: 32, 16>}, {transform_indices = @transform_3, window_bounds = array<i64: 32, 32>}, {transform_indices = @transform_4, window_bounds = array<i64: 32, 16>}]} {
    %c0 = arith.constant 0 : index
    %c0_0 = arith.constant 0 : index
    %0 = vector.load %arg5[%c0, %c0_0] : memref<32x32xf32, #tpu.memory_space<vmem>>, vector<32x32xf32>
    %c0_i32 = arith.constant 0 : i32
    %1 = arith.cmpi eq, %arg1, %c0_i32 : i32
    %2 = arith.extui %1 : i1 to i32
    %c0_i32_1 = arith.constant 0 : i32
    %3 = arith.cmpi ne, %2, %c0_i32_1 : i32
    scf.if %3 {
      %cst_30 = arith.constant 0xFF800000 : f32
      %47 = vector.broadcast %cst_30 : f32 to vector<32x1xf32>
      %c0_31 = arith.constant 0 : index
      %c0_32 = arith.constant 0 : index
      %48 = vector.load %arg7[%c0_31, %c0_32] : memref<32x1xf32, #tpu.memory_space<vmem>>, vector<32x1xf32>
      tpu.vector_store %arg7[%c0_31, %c0_32], %47 {strides = array<i32>} : memref<32x1xf32, #tpu.memory_space<vmem>>, vector<32x1xf32>,
      %cst_33 = arith.constant 0.000000e+00 : f32
      %49 = vector.broadcast %cst_33 : f32 to vector<32x1xf32>
      %c0_34 = arith.constant 0 : index
      %c0_35 = arith.constant 0 : index
      %50 = vector.load %arg8[%c0_34, %c0_35] : memref<32x1xf32, #tpu.memory_space<vmem>>, vector<32x1xf32>
      tpu.vector_store %arg8[%c0_34, %c0_35], %49 {strides = array<i32>} : memref<32x1xf32, #tpu.memory_space<vmem>>, vector<32x1xf32>,
      %cst_36 = arith.constant 0.000000e+00 : f32
      %51 = vector.broadcast %cst_36 : f32 to vector<32x16xf32>
      %c0_37 = arith.constant 0 : index
      %c0_38 = arith.constant 0 : index
      %52 = vector.load %arg9[%c0_37, %c0_38] : memref<32x16xf32, #tpu.memory_space<vmem>>, vector<32x16xf32>
      tpu.vector_store %arg9[%c0_37, %c0_38], %51 {strides = array<i32>} : memref<32x16xf32, #tpu.memory_space<vmem>>, vector<32x16xf32>,
    } else {
    }
    %c0_2 = arith.constant 0 : index
    %c0_3 = arith.constant 0 : index
    %4 = vector.load %arg2[%c0_2, %c0_3] : memref<32x1xf32, #tpu.memory_space<vmem>>, vector<32x1xf32>
    %c0_4 = arith.constant 0 : index
    %c0_5 = arith.constant 0 : index
    %5 = vector.load %arg3[%c0_4, %c0_5] : memref<1x32xf32, #tpu.memory_space<vmem>>, vector<1x32xf32>
    %6 = vector.broadcast %4 : vector<32x1xf32> to vector<32x32xf32>
    %7 = vector.broadcast %5 : vector<1x32xf32> to vector<32x32xf32>
    %8 = arith.addf %6, %7 : vector<32x32xf32>
    %9 = arith.mulf %8, %0 : vector<32x32xf32>
    %cst = arith.constant 0.000000e+00 : f32
    %10 = vector.broadcast %cst : f32 to vector<32x32xf32>
    %11 = arith.cmpf ogt, %9, %10 : vector<32x32xf32>
    %cst_6 = arith.constant 2.000000e-01 : f32
    %12 = vector.broadcast %cst_6 : f32 to vector<32x32xf32>
    %13 = arith.mulf %12, %9 : vector<32x32xf32>
    %14 = arith.select %11, %9, %13 : vector<32x32xi1>, vector<32x32xf32>
    %cst_7 = arith.constant 0.000000e+00 : f32
    %15 = vector.broadcast %cst_7 : f32 to vector<32x32xf32>
    %16 = arith.cmpf oge, %0, %15 : vector<32x32xf32>
    %cst_8 = arith.constant -9.000000e+15 : f32
    %17 = vector.broadcast %cst_8 : f32 to vector<32x32xf32>
    %18 = arith.select %16, %14, %17 : vector<32x32xi1>, vector<32x32xf32>
    %c0_9 = arith.constant 0 : index
    %c0_10 = arith.constant 0 : index
    %19 = vector.load %arg7[%c0_9, %c0_10] : memref<32x1xf32, #tpu.memory_space<vmem>>, vector<32x1xf32>
    %cst_11 = arith.constant dense<0xFF800000> : vector<32xf32>
    %20 = vector.multi_reduction <maximumf>, %18, %cst_11 [1] : vector<32x32xf32> to vector<32xf32>
    %21 = vector.shape_cast %20 : vector<32xf32> to vector<32x1xf32>
    %22 = arith.maximumf %19, %21 : vector<32x1xf32>
    %c0_12 = arith.constant 0 : index
    %c0_13 = arith.constant 0 : index
    %23 = vector.load %arg7[%c0_12, %c0_13] : memref<32x1xf32, #tpu.memory_space<vmem>>, vector<32x1xf32>
    %24 = arith.subf %23, %22 : vector<32x1xf32>
    %25 = math.exp %24 : vector<32x1xf32>
    %26 = vector.broadcast %22 : vector<32x1xf32> to vector<32x32xf32>
    %27 = arith.subf %18, %26 : vector<32x32xf32>
    %28 = math.exp %27 : vector<32x32xf32>
    %c0_14 = arith.constant 0 : index
    %c0_15 = arith.constant 0 : index
    %29 = vector.load %arg8[%c0_14, %c0_15] : memref<32x1xf32, #tpu.memory_space<vmem>>, vector<32x1xf32>
    %30 = arith.mulf %25, %29 : vector<32x1xf32>
    %cst_16 = arith.constant dense<0.000000e+00> : vector<32xf32>
    %31 = vector.multi_reduction <add>, %28, %cst_16 [1] : vector<32x32xf32> to vector<32xf32>
    %32 = vector.shape_cast %31 : vector<32xf32> to vector<32x1xf32>
    %33 = arith.addf %30, %32 : vector<32x1xf32>
    %c0_17 = arith.constant 0 : index
    %c0_18 = arith.constant 0 : index
    %34 = vector.load %arg8[%c0_17, %c0_18] : memref<32x1xf32, #tpu.memory_space<vmem>>, vector<32x1xf32>
    tpu.vector_store %arg8[%c0_17, %c0_18], %33 {strides = array<i32>} : memref<32x1xf32, #tpu.memory_space<vmem>>, vector<32x1xf32>,
    %c0_19 = arith.constant 0 : index
    %c0_20 = arith.constant 0 : index
    %35 = vector.load %arg9[%c0_19, %c0_20] : memref<32x16xf32, #tpu.memory_space<vmem>>, vector<32x16xf32>
    %36 = vector.broadcast %25 : vector<32x1xf32> to vector<32x16xf32>
    %37 = arith.mulf %36, %35 : vector<32x16xf32>
    %38 = arith.truncf %28 : vector<32x32xf32> to vector<32x32xbf16>
    %c0_21 = arith.constant 0 : index
    %c0_22 = arith.constant 0 : index
    %39 = vector.load %arg4[%c0_21, %c0_22] : memref<32x16xbf16, #tpu.memory_space<vmem>>, vector<32x16xbf16>
    %cst_23 = arith.constant dense<0.000000e+00> : vector<32x16xf32>
    %40 = tpu.matmul %38, %39, %cst_23 {dimension_numbers = #tpu.dot_dimension_numbers<[1], [0], [0], [1], [0, 0, 1, 1], [], []>} : vector<32x32xbf16>, vector<32x16xbf16>, vector<32x16xf32> -> vector<32x16xf32>
    %41 = arith.addf %37, %40 : vector<32x16xf32>
    %c0_24 = arith.constant 0 : index
    %c0_25 = arith.constant 0 : index
    %42 = vector.load %arg9[%c0_24, %c0_25] : memref<32x16xf32, #tpu.memory_space<vmem>>, vector<32x16xf32>
    tpu.vector_store %arg9[%c0_24, %c0_25], %41 {strides = array<i32>} : memref<32x16xf32, #tpu.memory_space<vmem>>, vector<32x16xf32>,
    %c0_26 = arith.constant 0 : index
    %c0_27 = arith.constant 0 : index
    %43 = vector.load %arg7[%c0_26, %c0_27] : memref<32x1xf32, #tpu.memory_space<vmem>>, vector<32x1xf32>
    tpu.vector_store %arg7[%c0_26, %c0_27], %22 {strides = array<i32>} : memref<32x1xf32, #tpu.memory_space<vmem>>, vector<32x1xf32>,
    %c0_i32_28 = arith.constant 0 : i32
    %44 = arith.cmpi eq, %arg1, %c0_i32_28 : i32
    %45 = arith.extui %44 : i1 to i32
    %c0_i32_29 = arith.constant 0 : i32
    %46 = arith.cmpi ne, %45, %c0_i32_29 : i32
    scf.if %46 {
      %c0_30 = arith.constant 0 : index
      %c0_31 = arith.constant 0 : index
      %47 = vector.load %arg9[%c0_30, %c0_31] : memref<32x16xf32, #tpu.memory_space<vmem>>, vector<32x16xf32>
      %c0_32 = arith.constant 0 : index
      %c0_33 = arith.constant 0 : index
      %48 = vector.load %arg8[%c0_32, %c0_33] : memref<32x1xf32, #tpu.memory_space<vmem>>, vector<32x1xf32>
      %49 = tpu.reciprocal %48 {approx = true} : vector<32x1xf32> -> vector<32x1xf32>
      %50 = vector.broadcast %49 : vector<32x1xf32> to vector<32x16xf32>
      %51 = arith.mulf %47, %50 : vector<32x16xf32>
      %cst_34 = arith.constant 0.000000e+00 : f32
      %52 = vector.broadcast %cst_34 : f32 to vector<32x16xf32>
      %53 = arith.cmpf ogt, %51, %52 : vector<32x16xf32>
      %cst_35 = arith.constant 0.000000e+00 : f32
      %54 = vector.broadcast %cst_35 : f32 to vector<32x16xf32>
      %55 = arith.minimumf %51, %54 : vector<32x16xf32>
      %56 = math.exp %55 : vector<32x16xf32>
      %cst_36 = arith.constant 1.000000e+00 : f32
      %57 = vector.broadcast %cst_36 : f32 to vector<32x16xf32>
      %58 = arith.subf %56, %57 : vector<32x16xf32>
      %59 = arith.select %53, %51, %58 : vector<32x16xi1>, vector<32x16xf32>
      %60 = arith.mulf %59, %59 : vector<32x16xf32>
      %cst_37 = arith.constant dense<0.000000e+00> : vector<32xf32>
      %61 = vector.multi_reduction <add>, %60, %cst_37 [1] : vector<32x16xf32> to vector<32xf32>
      %62 = vector.shape_cast %61 : vector<32xf32> to vector<32x1xf32>
      %cst_38 = arith.constant 1.000000e-24 : f32
      %63 = vector.broadcast %cst_38 : f32 to vector<32x1xf32>
      %64 = arith.maximumf %62, %63 : vector<32x1xf32>
      %65 = math.rsqrt %64 : vector<32x1xf32>
      %66 = vector.broadcast %65 : vector<32x1xf32> to vector<32x16xf32>
      %67 = arith.mulf %59, %66 : vector<32x16xf32>
      %c0_39 = arith.constant 0 : index
      %c0_40 = arith.constant 0 : index
      %68 = vector.load %arg6[%c0_39, %c0_40] : memref<32x16xf32, #tpu.memory_space<vmem>>, vector<32x16xf32>
      tpu.vector_store %arg6[%c0_39, %c0_40], %67 {strides = array<i32>} : memref<32x16xf32, #tpu.memory_space<vmem>>, vector<32x16xf32>,
    } else {
    }
    return
  }
  func.func @transform_0(%arg0: i32, %arg1: i32) -> (i32, i32) {
    %c0_i32 = arith.constant 0 : i32
    %c0_i32_0 = arith.constant 0 : i32
    return %arg0, %c0_i32 : i32, i32
  }
  func.func @transform_1(%arg0: i32, %arg1: i32) -> (i32, i32) {
    %c0_i32 = arith.constant 0 : i32
    %c0_i32_0 = arith.constant 0 : i32
    return %c0_i32, %arg1 : i32, i32
  }
  func.func @transform_2(%arg0: i32, %arg1: i32) -> (i32, i32) {
    %c0_i32 = arith.constant 0 : i32
    %c0_i32_0 = arith.constant 0 : i32
    return %arg1, %c0_i32 : i32, i32
  }
  func.func @transform_3(%arg0: i32, %arg1: i32) -> (i32, i32) {
    %c0_i32 = arith.constant 0 : i32
    return %arg0, %arg1 : i32, i32
  }
  func.func @transform_4(%arg0: i32, %arg1: i32) -> (i32, i32) {
    %c0_i32 = arith.constant 0 : i32
    %c0_i32_0 = arith.constant 0 : i32
    return %arg0, %c0_i32 : i32, i32
  }
}

module attributes {stable_mosaic.version = 11 : i64} {
  func.func @_project_kernel(%arg0: i32, %arg1: memref<32x16xf32, #tpu.memory_space<vmem>>, %arg2: memref<16x18xf32, #tpu.memory_space<vmem>>, %arg3: memref<32x16xbf16, #tpu.memory_space<vmem>>, %arg4: memref<32x1xf32, #tpu.memory_space<vmem>>, %arg5: memref<1x32xf32, #tpu.memory_space<vmem>>) attributes {dimension_semantics = [#tpu.dimension_semantics<parallel>], iteration_bounds = array<i64: 1>, scalar_prefetch = 0 : i64, scratch_operands = 0 : i64, tpu.core_type = #tpu.core_type<tc>, window_params = [{transform_indices = @transform_0, window_bounds = array<i64: 32, 16>}, {pipeline_mode = #tpu.pipeline_mode<synchronous>, transform_indices = @transform_1, window_bounds = array<i64: 16, 18>}, {transform_indices = @transform_2, window_bounds = array<i64: 32, 16>}, {transform_indices = @transform_3, window_bounds = array<i64: 32, 1>}, {transform_indices = @transform_4, window_bounds = array<i64: 1, 32>}]} {
    %c0 = arith.constant 0 : index
    %c0_0 = arith.constant 0 : index
    %0 = vector.load %arg1[%c0, %c0_0] : memref<32x16xf32, #tpu.memory_space<vmem>>, vector<32x16xf32>
    %c0_1 = arith.constant 0 : index
    %c0_2 = arith.constant 0 : index
    %1 = vector.load %arg2[%c0_1, %c0_2] : memref<16x18xf32, #tpu.memory_space<vmem>>, vector<16x18xf32>
    %cst = arith.constant dense<0.000000e+00> : vector<32x18xf32>
    %2 = tpu.matmul %0, %1, %cst {dimension_numbers = #tpu.dot_dimension_numbers<[1], [0], [0], [1], [0, 0, 1, 1], [], []>} : vector<32x16xf32>, vector<16x18xf32>, vector<32x18xf32> -> vector<32x18xf32>
    %3 = vector.extract_strided_slice %2 {offsets = [0, 0], sizes = [32, 16], strides = [1, 1]} : vector<32x18xf32> to vector<32x16xf32>
    %4 = arith.truncf %3 : vector<32x16xf32> to vector<32x16xbf16>
    %c0_3 = arith.constant 0 : index
    %c0_4 = arith.constant 0 : index
    %5 = vector.load %arg3[%c0_3, %c0_4] : memref<32x16xbf16, #tpu.memory_space<vmem>>, vector<32x16xbf16>
    tpu.vector_store %arg3[%c0_3, %c0_4], %4 {strides = array<i32>} : memref<32x16xbf16, #tpu.memory_space<vmem>>, vector<32x16xbf16>,
    %6 = vector.extract_strided_slice %2 {offsets = [0, 16], sizes = [32, 1], strides = [1, 1]} : vector<32x18xf32> to vector<32x1xf32>
    %c0_5 = arith.constant 0 : index
    %c0_6 = arith.constant 0 : index
    %7 = vector.load %arg4[%c0_5, %c0_6] : memref<32x1xf32, #tpu.memory_space<vmem>>, vector<32x1xf32>
    tpu.vector_store %arg4[%c0_5, %c0_6], %6 {strides = array<i32>} : memref<32x1xf32, #tpu.memory_space<vmem>>, vector<32x1xf32>,
    %8 = vector.extract_strided_slice %2 {offsets = [0, 17], sizes = [32, 1], strides = [1, 1]} : vector<32x18xf32> to vector<32x1xf32>
    %9 = tpu.transpose %8, [1, 0] : vector<32x1xf32> -> vector<1x32xf32>
    %c0_7 = arith.constant 0 : index
    %c0_8 = arith.constant 0 : index
    %10 = vector.load %arg5[%c0_7, %c0_8] : memref<1x32xf32, #tpu.memory_space<vmem>>, vector<1x32xf32>
    tpu.vector_store %arg5[%c0_7, %c0_8], %9 {strides = array<i32>} : memref<1x32xf32, #tpu.memory_space<vmem>>, vector<1x32xf32>,
    return
  }
  func.func @transform_0(%arg0: i32) -> (i32, i32) {
    %c0_i32 = arith.constant 0 : i32
    %c0_i32_0 = arith.constant 0 : i32
    return %arg0, %c0_i32 : i32, i32
  }
  func.func @transform_1(%arg0: i32) -> (i32, i32) {
    %c0_i32 = arith.constant 0 : i32
    %c0_i32_0 = arith.constant 0 : i32
    %c0_i32_1 = arith.constant 0 : i32
    return %c0_i32, %c0_i32_0 : i32, i32
  }
  func.func @transform_2(%arg0: i32) -> (i32, i32) {
    %c0_i32 = arith.constant 0 : i32
    %c0_i32_0 = arith.constant 0 : i32
    return %arg0, %c0_i32 : i32, i32
  }
  func.func @transform_3(%arg0: i32) -> (i32, i32) {
    %c0_i32 = arith.constant 0 : i32
    %c0_i32_0 = arith.constant 0 : i32
    return %arg0, %c0_i32 : i32, i32
  }
  func.func @transform_4(%arg0: i32) -> (i32, i32) {
    %c0_i32 = arith.constant 0 : i32
    %c0_i32_0 = arith.constant 0 : i32
    return %c0_i32, %arg0 : i32, i32
  }
}

module attributes {stable_mosaic.version = 11 : i64} {
  func.func @_decode_kernel(%arg0: i32, %arg1: i32, %arg2: memref<32x16xf32, #tpu.memory_space<vmem>>, %arg3: memref<32x16xf32, #tpu.memory_space<vmem>>, %arg4: memref<4x16xf32, #tpu.memory_space<vmem>>, %arg5: memref<32x32xf32, #tpu.memory_space<vmem>>, %arg6: memref<32x4xf32, #tpu.memory_space<vmem>>) attributes {dimension_semantics = [#tpu.dimension_semantics<parallel>, #tpu.dimension_semantics<arbitrary>], iteration_bounds = array<i64: 1, 1>, scalar_prefetch = 0 : i64, scratch_operands = 0 : i64, tpu.core_type = #tpu.core_type<tc>, window_params = [{transform_indices = @transform_0, window_bounds = array<i64: 32, 16>}, {transform_indices = @transform_1, window_bounds = array<i64: 32, 16>}, {pipeline_mode = #tpu.pipeline_mode<synchronous>, transform_indices = @transform_2, window_bounds = array<i64: 4, 16>}, {transform_indices = @transform_3, window_bounds = array<i64: 32, 32>}, {transform_indices = @transform_4, window_bounds = array<i64: 32, 4>}]} {
    %c0 = arith.constant 0 : index
    %c0_0 = arith.constant 0 : index
    %0 = vector.load %arg2[%c0, %c0_0] : memref<32x16xf32, #tpu.memory_space<vmem>>, vector<32x16xf32>
    %1 = arith.truncf %0 : vector<32x16xf32> to vector<32x16xbf16>
    %c0_1 = arith.constant 0 : index
    %c0_2 = arith.constant 0 : index
    %2 = vector.load %arg3[%c0_1, %c0_2] : memref<32x16xf32, #tpu.memory_space<vmem>>, vector<32x16xf32>
    %3 = arith.truncf %2 : vector<32x16xf32> to vector<32x16xbf16>
    %cst = arith.constant dense<0.000000e+00> : vector<32x32xf32>
    %4 = tpu.matmul %1, %3, %cst {dimension_numbers = #tpu.dot_dimension_numbers<[1], [1], [0], [0], [0, 0, 1, 0], [], []>} : vector<32x16xbf16>, vector<32x16xbf16>, vector<32x32xf32> -> vector<32x32xf32>
    %cst_3 = arith.constant 5.000000e-01 : f32
    %5 = vector.broadcast %cst_3 : f32 to vector<32x32xf32>
    %6 = arith.mulf %5, %4 : vector<32x32xf32>
    %7 = math.tanh %6 : vector<32x32xf32>
    %cst_4 = arith.constant 5.000000e-01 : f32
    %8 = vector.broadcast %cst_4 : f32 to vector<32x32xf32>
    %9 = arith.mulf %8, %7 : vector<32x32xf32>
    %cst_5 = arith.constant 5.000000e-01 : f32
    %10 = vector.broadcast %cst_5 : f32 to vector<32x32xf32>
    %11 = arith.addf %9, %10 : vector<32x32xf32>
    %c0_6 = arith.constant 0 : index
    %c0_7 = arith.constant 0 : index
    %12 = vector.load %arg5[%c0_6, %c0_7] : memref<32x32xf32, #tpu.memory_space<vmem>>, vector<32x32xf32>
    tpu.vector_store %arg5[%c0_6, %c0_7], %11 {strides = array<i32>} : memref<32x32xf32, #tpu.memory_space<vmem>>, vector<32x32xf32>,
    %c0_i32 = arith.constant 0 : i32
    %13 = arith.cmpi eq, %arg1, %c0_i32 : i32
    %14 = arith.extui %13 : i1 to i32
    %c0_i32_8 = arith.constant 0 : i32
    %15 = arith.cmpi ne, %14, %c0_i32_8 : i32
    scf.if %15 {
      %c0_9 = arith.constant 0 : index
      %c0_10 = arith.constant 0 : index
      %16 = vector.load %arg4[%c0_9, %c0_10] : memref<4x16xf32, #tpu.memory_space<vmem>>, vector<4x16xf32>
      %cst_11 = arith.constant dense<0.000000e+00> : vector<32x4xf32>
      %17 = tpu.matmul %0, %16, %cst_11 {dimension_numbers = #tpu.dot_dimension_numbers<[1], [1], [0], [0], [0, 0, 1, 0], [], []>} : vector<32x16xf32>, vector<4x16xf32>, vector<32x4xf32> -> vector<32x4xf32>
      %18 = arith.mulf %0, %0 : vector<32x16xf32>
      %cst_12 = arith.constant dense<0.000000e+00> : vector<32xf32>
      %19 = vector.multi_reduction <add>, %18, %cst_12 [1] : vector<32x16xf32> to vector<32xf32>
      %20 = vector.shape_cast %19 : vector<32xf32> to vector<32x1xf32>
      %21 = arith.mulf %16, %16 : vector<4x16xf32>
      %cst_13 = arith.constant dense<0.000000e+00> : vector<4xf32>
      %22 = vector.multi_reduction <add>, %21, %cst_13 [1] : vector<4x16xf32> to vector<4xf32>
      %23 = vector.shape_cast %22 : vector<4xf32> to vector<4x1xf32>
      %24 = tpu.transpose %23, [1, 0] : vector<4x1xf32> -> vector<1x4xf32>
      %25 = vector.broadcast %20 : vector<32x1xf32> to vector<32x4xf32>
      %26 = vector.broadcast %24 : vector<1x4xf32> to vector<32x4xf32>
      %27 = arith.addf %25, %26 : vector<32x4xf32>
      %cst_14 = arith.constant 2.000000e+00 : f32
      %28 = vector.broadcast %cst_14 : f32 to vector<32x4xf32>
      %29 = arith.mulf %28, %17 : vector<32x4xf32>
      %30 = arith.subf %27, %29 : vector<32x4xf32>
      %cst_15 = arith.constant 0.000000e+00 : f32
      %31 = vector.broadcast %cst_15 : f32 to vector<32x4xf32>
      %32 = arith.maximumf %30, %31 : vector<32x4xf32>
      %cst_16 = arith.constant 1.000000e+00 : f32
      %33 = vector.broadcast %cst_16 : f32 to vector<32x4xf32>
      %34 = arith.mulf %32, %33 : vector<32x4xf32>
      %cst_17 = arith.constant 1.000000e+00 : f32
      %35 = vector.broadcast %cst_17 : f32 to vector<32x4xf32>
      %36 = arith.addf %35, %34 : vector<32x4xf32>
      %37 = tpu.reciprocal %36 {approx = true} : vector<32x4xf32> -> vector<32x4xf32>
      %38 = math.sqrt %37 : vector<32x4xf32>
      %39 = arith.mulf %37, %38 : vector<32x4xf32>
      %cst_18 = arith.constant dense<0.000000e+00> : vector<32xf32>
      %40 = vector.multi_reduction <add>, %39, %cst_18 [1] : vector<32x4xf32> to vector<32xf32>
      %41 = vector.shape_cast %40 : vector<32xf32> to vector<32x1xf32>
      %42 = tpu.reciprocal %41 {approx = true} : vector<32x1xf32> -> vector<32x1xf32>
      %43 = vector.broadcast %42 : vector<32x1xf32> to vector<32x4xf32>
      %44 = arith.mulf %39, %43 : vector<32x4xf32>
      %c0_19 = arith.constant 0 : index
      %c0_20 = arith.constant 0 : index
      %45 = vector.load %arg6[%c0_19, %c0_20] : memref<32x4xf32, #tpu.memory_space<vmem>>, vector<32x4xf32>
      tpu.vector_store %arg6[%c0_19, %c0_20], %44 {strides = array<i32>} : memref<32x4xf32, #tpu.memory_space<vmem>>, vector<32x4xf32>,
    } else {
    }
    return
  }
  func.func @transform_0(%arg0: i32, %arg1: i32) -> (i32, i32) {
    %c0_i32 = arith.constant 0 : i32
    %c0_i32_0 = arith.constant 0 : i32
    return %arg0, %c0_i32 : i32, i32
  }
  func.func @transform_1(%arg0: i32, %arg1: i32) -> (i32, i32) {
    %c0_i32 = arith.constant 0 : i32
    %c0_i32_0 = arith.constant 0 : i32
    return %arg1, %c0_i32 : i32, i32
  }
  func.func @transform_2(%arg0: i32, %arg1: i32) -> (i32, i32) {
    %c0_i32 = arith.constant 0 : i32
    %c0_i32_0 = arith.constant 0 : i32
    %c0_i32_1 = arith.constant 0 : i32
    return %c0_i32, %c0_i32_0 : i32, i32
  }
  func.func @transform_3(%arg0: i32, %arg1: i32) -> (i32, i32) {
    %c0_i32 = arith.constant 0 : i32
    return %arg0, %arg1 : i32, i32
  }
  func.func @transform_4(%arg0: i32, %arg1: i32) -> (i32, i32) {
    %c0_i32 = arith.constant 0 : i32
    %c0_i32_0 = arith.constant 0 : i32
    return %arg0, %c0_i32 : i32, i32
  }
}

</mosaic_0001>

<llo_original>
// kernel: daegc_forward.9
$region0: #{daegc_forward.9}
  #allocation0 [shape = 'u32[]', space=smem, size = 0x4, offset = 0x4, fixed_abs, tag = 'smem constant byte address 0x4 - core index']
  #allocation1 [shape = 'u32[144,128]{1,0:T(1,128)}', space=vmem, size = 0x12000, scoped, tag = 'internal scratch']
  %s0 = inlined_call_operand.vmem [shape: f32[32,32], index: 0, kind: input, shape index: {}]
  %s1 = inlined_call_operand.vmem [shape: f32[32,18], index: 1, kind: input, shape index: {}]
  %s2 = inlined_call_operand.vmem [shape: bf16[32,16], index: 2, kind: output, shape index: {0}]
  %s3 = inlined_call_operand.vmem [shape: f32[32,1], index: 3, kind: output, shape index: {1}]
  %s4 = inlined_call_operand.vmem [shape: f32[1,32], index: 4, kind: output, shape index: {2}]
  %5 = xla_tuple %s2, %s3, %s4
  %s6 = sld [smem:[#allocation0]]
  $region34: #{daegc_forward.9} parent=0
    _
  %s8 = ssub.s32 1, %s6
  %s9 = scalar_select 0, %s8, %s6
  // Predicated region
  $region2: #{daegc_forward.9} parent=0 // pred_check
    _
  $region3: #{daegc_forward.9} parent=0 // pred_check_branch
    %11 = sbr.rel (0) target = $region5
  $region4: #{daegc_forward.9} parent=0 // pred_region
    _
  $region5: #{daegc_forward.9} parent=0 // pred_fallthru
    _
  // Predicated region
  $region6: #{daegc_forward.9} parent=0 // pred_check
    _
  $region7: #{daegc_forward.9} parent=0 // pred_check_branch
    %13 = sbr.rel (0) target = $region9
  $region8: #{daegc_forward.9} parent=0 // pred_region
    _
  $region9: #{daegc_forward.9} parent=0 // pred_fallthru
    _
  %v14 = vld [vmem:[%s0] sm:$0xff]
  %v15 = vld [vmem:[%s0 + $0x8] sm:$0xff]
  %v16 = vld [vmem:[%s0 + $0x10] sm:$0xff]
  %v17 = vld [vmem:[%s0 + $0x18] sm:$0xff]
  %v18 = vld [vmem:[%s1] sm:$0xff]
  %v19 = vld [vmem:[%s1 + $0x8] sm:$0xff]
  %v20 = vld [vmem:[%s1 + $0x10] sm:$0xff]
  %v21 = vld [vmem:[%s1 + $0x18] sm:$0xff]
  %vm22 = vcmask 261120
  %v24 = vsel %vm22, %v14, 0
  %v27 = vsel %vm22, %v15, 0
  %v30 = vsel %vm22, %v16, 0
  %v33 = vsel %vm22, %v17, 0
  %35 = vmatprep.subr.mxu0 0.0
  %36 = vmatpush1.msra.mxu0 %v18
  %37 = vmatprep.subr.mxu0 0.0
  %38 = vmatpush1.msra.mxu0 %v19
  %39 = vmatprep.subr.mxu0 0.0
  %40 = vmatpush1.msra.mxu0 %v20
  %41 = vmatprep.subr.mxu0 0.0
  %42 = vmatpush1.msra.mxu0 %v21
  %43 = vmatprep.subr.mxu0 0.0
  %44 = vmatpush1.msra.mxu0 0.0
  %45 = vmatprep.subr.mxu0 0.0
  %46 = vmatpush1.msra.mxu0 0.0
  %47 = vmatprep.subr.mxu0 0.0
  %48 = vmatpush1.msra.mxu0 0.0
  %49 = vmatprep.subr.mxu0 0.0
  %50 = vmatpush1.msra.mxu0 0.0
  %51 = vmatprep.subr.mxu0 0.0
  %52 = vmatpush1.msra.mxu0 0.0
  %53 = vmatprep.subr.mxu0 0.0
  %54 = vmatpush1.msra.mxu0 0.0
  %55 = vmatprep.subr.mxu0 0.0
  %56 = vmatpush1.msra.mxu0 0.0
  %57 = vmatprep.subr.mxu0 0.0
  %58 = vmatpush1.msra.mxu0 0.0
  %59 = vmatprep.subr.mxu0 0.0
  %60 = vmatpush1.msra.mxu0 0.0
  %61 = vmatprep.subr.mxu0 0.0
  %62 = vmatpush1.msra.mxu0 0.0
  %63 = vmatprep.subr.mxu0 0.0
  %64 = vmatpush1.msra.mxu0 0.0
  %65 = vmatprep.subr.mxu0 0.0
  %66 = vmatpush1.msra.mxu0 0.0
  %67 = vmatprep.subr.mxu0 0.0
  %68 = vmatpush1.msra.mxu0 0.0
  %69 = vmatprep.subr.mxu0 0.0
  %70 = vmatpush1.msra.mxu0 0.0
  %71 = vmatprep.subr.mxu0 0.0
  %72 = vmatpush1.msra.mxu0 0.0
  %73 = vmatprep.subr.mxu0 0.0
  %74 = vmatpush1.msra.mxu0 0.0
  %75 = vmatprep.subr.mxu0 0.0
  %76 = vmatpush1.msra.mxu0 0.0
  %77 = vmatprep.subr.mxu0 0.0
  %78 = vmatpush1.msra.mxu0 0.0
  %79 = vmatprep.subr.mxu0 0.0
  %80 = vmatpush1.msra.mxu0 0.0
  %81 = vmatprep.subr.mxu0 0.0
  %82 = vmatpush1.msra.mxu0 0.0
  %83 = vmatprep.subr.mxu0 0.0
  %84 = vmatpush1.msra.mxu0 0.0
  %85 = vmatprep.subr.mxu0 0.0
  %86 = vmatpush1.msra.mxu0 0.0
  %87 = vmatprep.subr.mxu0 0.0
  %88 = vmatpush1.msra.mxu0 0.0
  %89 = vmatprep.subr.mxu0 0.0
  %90 = vmatpush1.msra.mxu0 0.0
  %91 = vmatprep.subr.mxu0 0.0
  %92 = vmatpush1.msra.mxu0 0.0
  %93 = vmatprep.subr.mxu0 0.0
  %94 = vmatpush1.msra.mxu0 0.0
  %95 = vmatprep.subr.mxu0 0.0
  %96 = vmatpush1.msra.mxu0 0.0
  %97 = vmatprep.subr.mxu0 0.0
  %98 = vmatpush1.msra.mxu0 0.0
  %99 = vmatprep.mubr.f32.mxu0 0.0
  %100 = vmatmul.mubr.f32.gmra.mrb[0].mxu0 %v24
  %v101 = vpop.f32.mrb[0].mxu0
  %v102 = vadd.f32 0.0, %v101
  %v103 = vpop.f32.mrb[0].mxu0
  %104 = vmatprep.mubr.f32.mxu0 0.0
  %105 = vmatmul.mubr.f32.gmra.mrb[0].mxu0 %v27
  %v106 = vpop.f32.mrb[0].mxu0
  %v107 = vadd.f32 0.0, %v106
  %v108 = vpop.f32.mrb[0].mxu0
  %109 = vmatprep.mubr.f32.mxu0 0.0
  %110 = vmatmul.mubr.f32.gmra.mrb[0].mxu0 %v30
  %v111 = vpop.f32.mrb[0].mxu0
  %v112 = vadd.f32 0.0, %v111
  %v113 = vpop.f32.mrb[0].mxu0
  %114 = vmatprep.mubr.f32.mxu0 0.0
  %115 = vmatmul.mubr.f32.gmra.mrb[0].mxu0 %v33
  %v116 = vpop.f32.mrb[0].mxu0
  %v117 = vadd.f32 0.0, %v116
  %v118 = vpop.f32.mrb[0].mxu0
  %119 = vdwg.mxu0
  %v120 = vpack.c.bf16 %v107, %v102
  %v121 = vpack.c.bf16 %v117, %v112
  %v124 = vunpack.c.l.b16 %v120
  %v125 = vunpack.c.h.b16 %v120
  %v126 = vunpack.c.l.b16 %v121
  %v127 = vunpack.c.h.b16 %v121
  %v128 = vpack.c.b16 %v124, %v124
  %v129 = vpack.c.b16 %v125, %v125
  %v130 = vpack.c.b16 %v126, %v126
  %v131 = vpack.c.b16 %v127, %v127
  %vm136 = vcmask 125952
  %137 = vst.msk [vmem:[%s2] sm:$0xf] %vm136, %v128
  %138 = vst.msk [vmem:[%s2 + $0x4] sm:$0xf] %vm136, %v129
  %139 = vst.msk [vmem:[%s2 + $0x8] sm:$0xf] %vm136, %v130
  %140 = vst.msk [vmem:[%s2 + $0xc] sm:$0xf] %vm136, %v131
  %145 = vrot.lane.b32.xlu0 %v102, 112
  %v146 = vpop.permute.xlu0 %145
  %147 = vrot.lane.b32.xlu0 %v107, 112
  %v148 = vpop.permute.xlu0 %147
  %149 = vrot.lane.b32.xlu0 %v112, 112
  %v150 = vpop.permute.xlu0 %149
  %151 = vrot.lane.b32.xlu0 %v117, 112
  %v152 = vpop.permute.xlu0 %151
  %vm157 = vcmask 7168
  %158 = vst.msk [vmem:[%s3] sm:$0xff] %vm157, %v146
  %159 = vst.msk [vmem:[%s3 + $0x8] sm:$0xff] %vm157, %v148
  %160 = vst.msk [vmem:[%s3 + $0x10] sm:$0xff] %vm157, %v150
  %161 = vst.msk [vmem:[%s3 + $0x18] sm:$0xff] %vm157, %v152
  %162 = vrot.lane.b32.xlu0 %v102, 111
  %v163 = vpop.permute.xlu0 %162
  %164 = vrot.lane.b32.xlu0 %v107, 111
  %v165 = vpop.permute.xlu0 %164
  %166 = vrot.lane.b32.xlu0 %v112, 111
  %v167 = vpop.permute.xlu0 %166
  %168 = vrot.lane.b32.xlu0 %v117, 111
  %v169 = vpop.permute.xlu0 %168
  %174 = vxpose.xlu0.b32.start [1/16] %v163, 128
  %175 = vxpose.xlu0.b32.cont [2/16] %v165, 128
  %176 = vxpose.xlu0.b32.cont [3/16] %v167, 128
  %177 = vxpose.xlu0.b32.cont [4/16] %v169, 128
  %178 = vxpose.xlu0.b32.cont [5/16] 0.0, 128
  %179 = vxpose.xlu0.b32.cont [6/16] 0.0, 128
  %180 = vxpose.xlu0.b32.cont [7/16] 0.0, 128
  %181 = vxpose.xlu0.b32.cont [8/16] 0.0, 128
  %182 = vxpose.xlu0.b32.cont [9/16] 0.0, 128
  %183 = vxpose.xlu0.b32.cont [10/16] 0.0, 128
  %184 = vxpose.xlu0.b32.cont [11/16] 0.0, 128
  %185 = vxpose.xlu0.b32.cont [12/16] 0.0, 128
  %186 = vxpose.xlu0.b32.cont [13/16] 0.0, 128
  %187 = vxpose.xlu0.b32.cont [14/16] 0.0, 128
  %188 = vxpose.xlu0.b32.cont [15/16] 0.0, 128
  %189 = vxpose.xlu0.b32.end [16/16] 0.0, 128
  %v190 = vpop.trf.xlu0
  %v191 = vpop.trf.xlu0
  %v192 = vpop.trf.xlu0
  %v193 = vpop.trf.xlu0
  %v194 = vpop.trf.xlu0
  %v195 = vpop.trf.xlu0
  %v196 = vpop.trf.xlu0
  %v197 = vpop.trf.xlu0
  %v198 = vpop.trf.xlu0
  %v199 = vpop.trf.xlu0
  %v200 = vpop.trf.xlu0
  %v201 = vpop.trf.xlu0
  %v202 = vpop.trf.xlu0
  %v203 = vpop.trf.xlu0
  %v204 = vpop.trf.xlu0
  %v205 = vpop.trf.xlu0
  %vm206 = vcmask 253952
  %207 = vst.msk [vmem:[%s4] sm:$0x1] %vm206, %v190
  // Predicated region
  $region10: #{daegc_forward.9} parent=0 // pred_check
    _
  $region11: #{daegc_forward.9} parent=0 // pred_check_branch
    %209 = sbr.rel (0) target = $region13
  $region12: #{daegc_forward.9} parent=0 // pred_region
    _
  $region13: #{daegc_forward.9} parent=0 // pred_fallthru
    _
  // Predicated region
  $region14: #{daegc_forward.9} parent=0 // pred_check
    _
  $region15: #{daegc_forward.9} parent=0 // pred_check_branch
    %211 = sbr.rel (0) target = $region17
  $region16: #{daegc_forward.9} parent=0 // pred_region
    _
  $region17: #{daegc_forward.9} parent=0 // pred_fallthru
    _
  // Predicated region
  $region18: #{daegc_forward.9} parent=0 // pred_check
    _
  $region19: #{daegc_forward.9} parent=0 // pred_check_branch
    %213 = sbr.rel (0) target = $region21
  $region20: #{daegc_forward.9} parent=0 // pred_region
    _
  $region21: #{daegc_forward.9} parent=0 // pred_fallthru
    _
  // Predicated region
  $region22: #{daegc_forward.9} parent=0 // pred_check
    _
  $region23: #{daegc_forward.9} parent=0 // pred_check_branch
    %215 = sbr.rel (0) target = $region25
  $region24: #{daegc_forward.9} parent=0 // pred_region
    _
  $region25: #{daegc_forward.9} parent=0 // pred_fallthru
    _
  // Predicated region
  $region26: #{daegc_forward.9} parent=0 // pred_check
    _
  $region27: #{daegc_forward.9} parent=0 // pred_check_branch
    %217 = sbr.rel (0) target = $region29
  $region28: #{daegc_forward.9} parent=0 // pred_region
    _
  $region29: #{daegc_forward.9} parent=0 // pred_fallthru
    _
  // Predicated region
  $region30: #{daegc_forward.9} parent=0 // pred_check
    _
  $region31: #{daegc_forward.9} parent=0 // pred_check_branch
    %219 = sbr.rel (0) target = $region33
  $region32: #{daegc_forward.9} parent=0 // pred_region
    _
  $region33: #{daegc_forward.9} parent=0 // pred_fallthru
    _

// kernel: daegc_forward.7
$region0: #{daegc_forward.7}
  #allocation0 [shape = 'u32[]', space=smem, size = 0x4, offset = 0x4, fixed_abs, tag = 'smem constant byte address 0x4 - core index']
  #allocation1 [shape = 'u32[144,128]{1,0:T(1,128)}', space=vmem, size = 0x12000, scoped, tag = 'internal scratch']
  %s0 = inlined_call_operand.vmem [shape: f32[32,16], index: 0, kind: input, shape index: {}]
  %s1 = inlined_call_operand.vmem [shape: f32[16,34], index: 1, kind: input, shape index: {}]
  %s2 = inlined_call_operand.vmem [shape: bf16[32,32], index: 2, kind: output, shape index: {0}]
  %s3 = inlined_call_operand.vmem [shape: f32[32,1], index: 3, kind: output, shape index: {1}]
  %s4 = inlined_call_operand.vmem [shape: f32[1,32], index: 4, kind: output, shape index: {2}]
  %5 = xla_tuple %s2, %s3, %s4
  %s6 = sld [smem:[#allocation0]]
  $region34: #{daegc_forward.7} parent=0
    _
  %s8 = ssub.s32 1, %s6
  %s9 = scalar_select 0, %s8, %s6
  // Predicated region
  $region2: #{daegc_forward.7} parent=0 // pred_check
    _
  $region3: #{daegc_forward.7} parent=0 // pred_check_branch
    %11 = sbr.rel (0) target = $region5
  $region4: #{daegc_forward.7} parent=0 // pred_region
    _
  $region5: #{daegc_forward.7} parent=0 // pred_fallthru
    _
  // Predicated region
  $region6: #{daegc_forward.7} parent=0 // pred_check
    _
  $region7: #{daegc_forward.7} parent=0 // pred_check_branch
    %13 = sbr.rel (0) target = $region9
  $region8: #{daegc_forward.7} parent=0 // pred_region
    _
  $region9: #{daegc_forward.7} parent=0 // pred_fallthru
    _
  %v14 = vld [vmem:[%s0] sm:$0xff]
  %v15 = vld [vmem:[%s0 + $0x8] sm:$0xff]
  %v16 = vld [vmem:[%s0 + $0x10] sm:$0xff]
  %v17 = vld [vmem:[%s0 + $0x18] sm:$0xff]
  %v18 = vld [vmem:[%s1] sm:$0xff]
  %v19 = vld [vmem:[%s1 + $0x8] sm:$0xff]
  %vm20 = vcmask 130048
  %v22 = vsel %vm20, %v14, 0
  %v25 = vsel %vm20, %v15, 0
  %v28 = vsel %vm20, %v16, 0
  %v31 = vsel %vm20, %v17, 0
  %33 = vmatprep.subr.mxu0 0.0
  %34 = vmatpush1.msra.mxu0 %v18
  %35 = vmatprep.subr.mxu0 0.0
  %36 = vmatpush1.msra.mxu0 %v19
  %37 = vmatprep.subr.mxu0 0.0
  %38 = vmatpush1.msra.mxu0 0.0
  %39 = vmatprep.subr.mxu0 0.0
  %40 = vmatpush1.msra.mxu0 0.0
  %41 = vmatprep.subr.mxu0 0.0
  %42 = vmatpush1.msra.mxu0 0.0
  %43 = vmatprep.subr.mxu0 0.0
  %44 = vmatpush1.msra.mxu0 0.0
  %45 = vmatprep.subr.mxu0 0.0
  %46 = vmatpush1.msra.mxu0 0.0
  %47 = vmatprep.subr.mxu0 0.0
  %48 = vmatpush1.msra.mxu0 0.0
  %49 = vmatprep.subr.mxu0 0.0
  %50 = vmatpush1.msra.mxu0 0.0
  %51 = vmatprep.subr.mxu0 0.0
  %52 = vmatpush1.msra.mxu0 0.0
  %53 = vmatprep.subr.mxu0 0.0
  %54 = vmatpush1.msra.mxu0 0.0
  %55 = vmatprep.subr.mxu0 0.0
  %56 = vmatpush1.msra.mxu0 0.0
  %57 = vmatprep.subr.mxu0 0.0
  %58 = vmatpush1.msra.mxu0 0.0
  %59 = vmatprep.subr.mxu0 0.0
  %60 = vmatpush1.msra.mxu0 0.0
  %61 = vmatprep.subr.mxu0 0.0
  %62 = vmatpush1.msra.mxu0 0.0
  %63 = vmatprep.subr.mxu0 0.0
  %64 = vmatpush1.msra.mxu0 0.0
  %65 = vmatprep.subr.mxu0 0.0
  %66 = vmatpush1.msra.mxu0 0.0
  %67 = vmatprep.subr.mxu0 0.0
  %68 = vmatpush1.msra.mxu0 0.0
  %69 = vmatprep.subr.mxu0 0.0
  %70 = vmatpush1.msra.mxu0 0.0
  %71 = vmatprep.subr.mxu0 0.0
  %72 = vmatpush1.msra.mxu0 0.0
  %73 = vmatprep.subr.mxu0 0.0
  %74 = vmatpush1.msra.mxu0 0.0
  %75 = vmatprep.subr.mxu0 0.0
  %76 = vmatpush1.msra.mxu0 0.0
  %77 = vmatprep.subr.mxu0 0.0
  %78 = vmatpush1.msra.mxu0 0.0
  %79 = vmatprep.subr.mxu0 0.0
  %80 = vmatpush1.msra.mxu0 0.0
  %81 = vmatprep.subr.mxu0 0.0
  %82 = vmatpush1.msra.mxu0 0.0
  %83 = vmatprep.subr.mxu0 0.0
  %84 = vmatpush1.msra.mxu0 0.0
  %85 = vmatprep.subr.mxu0 0.0
  %86 = vmatpush1.msra.mxu0 0.0
  %87 = vmatprep.subr.mxu0 0.0
  %88 = vmatpush1.msra.mxu0 0.0
  %89 = vmatprep.subr.mxu0 0.0
  %90 = vmatpush1.msra.mxu0 0.0
  %91 = vmatprep.subr.mxu0 0.0
  %92 = vmatpush1.msra.mxu0 0.0
  %93 = vmatprep.subr.mxu0 0.0
  %94 = vmatpush1.msra.mxu0 0.0
  %95 = vmatprep.subr.mxu0 0.0
  %96 = vmatpush1.msra.mxu0 0.0
  %97 = vmatprep.mubr.f32.mxu0 0.0
  %98 = vmatmul.mubr.f32.gmra.mrb[0].mxu0 %v22
  %v99 = vpop.f32.mrb[0].mxu0
  %v100 = vadd.f32 0.0, %v99
  %v101 = vpop.f32.mrb[0].mxu0
  %102 = vmatprep.mubr.f32.mxu0 0.0
  %103 = vmatmul.mubr.f32.gmra.mrb[0].mxu0 %v25
  %v104 = vpop.f32.mrb[0].mxu0
  %v105 = vadd.f32 0.0, %v104
  %v106 = vpop.f32.mrb[0].mxu0
  %107 = vmatprep.mubr.f32.mxu0 0.0
  %108 = vmatmul.mubr.f32.gmra.mrb[0].mxu0 %v28
  %v109 = vpop.f32.mrb[0].mxu0
  %v110 = vadd.f32 0.0, %v109
  %v111 = vpop.f32.mrb[0].mxu0
  %112 = vmatprep.mubr.f32.mxu0 0.0
  %113 = vmatmul.mubr.f32.gmra.mrb[0].mxu0 %v31
  %v114 = vpop.f32.mrb[0].mxu0
  %v115 = vadd.f32 0.0, %v114
  %v116 = vpop.f32.mrb[0].mxu0
  %117 = vdwg.mxu0
  %v118 = vpack.c.bf16 %v105, %v100
  %v119 = vpack.c.bf16 %v115, %v110
  %v122 = vunpack.c.l.b16 %v118
  %v123 = vunpack.c.h.b16 %v118
  %v124 = vunpack.c.l.b16 %v119
  %v125 = vunpack.c.h.b16 %v119
  %v126 = vpack.c.b16 %v122, %v122
  %v127 = vpack.c.b16 %v123, %v123
  %v128 = vpack.c.b16 %v124, %v124
  %v129 = vpack.c.b16 %v125, %v125
  %vm134 = vcmask 257024
  %135 = vst.msk [vmem:[%s2] sm:$0xf] %vm134, %v126
  %136 = vst.msk [vmem:[%s2 + $0x4] sm:$0xf] %vm134, %v127
  %137 = vst.msk [vmem:[%s2 + $0x8] sm:$0xf] %vm134, %v128
  %138 = vst.msk [vmem:[%s2 + $0xc] sm:$0xf] %vm134, %v129
  %143 = vrot.lane.b32.xlu0 %v100, 96
  %v144 = vpop.permute.xlu0 %143
  %145 = vrot.lane.b32.xlu0 %v105, 96
  %v146 = vpop.permute.xlu0 %145
  %147 = vrot.lane.b32.xlu0 %v110, 96
  %v148 = vpop.permute.xlu0 %147
  %149 = vrot.lane.b32.xlu0 %v115, 96
  %v150 = vpop.permute.xlu0 %149
  %vm155 = vcmask 7168
  %156 = vst.msk [vmem:[%s3] sm:$0xff] %vm155, %v144
  %157 = vst.msk [vmem:[%s3 + $0x8] sm:$0xff] %vm155, %v146
  %158 = vst.msk [vmem:[%s3 + $0x10] sm:$0xff] %vm155, %v148
  %159 = vst.msk [vmem:[%s3 + $0x18] sm:$0xff] %vm155, %v150
  %160 = vrot.lane.b32.xlu0 %v100, 95
  %v161 = vpop.permute.xlu0 %160
  %162 = vrot.lane.b32.xlu0 %v105, 95
  %v163 = vpop.permute.xlu0 %162
  %164 = vrot.lane.b32.xlu0 %v110, 95
  %v165 = vpop.permute.xlu0 %164
  %166 = vrot.lane.b32.xlu0 %v115, 95
  %v167 = vpop.permute.xlu0 %166
  %172 = vxpose.xlu0.b32.start [1/16] %v161, 128
  %173 = vxpose.xlu0.b32.cont [2/16] %v163, 128
  %174 = vxpose.xlu0.b32.cont [3/16] %v165, 128
  %175 = vxpose.xlu0.b32.cont [4/16] %v167, 128
  %176 = vxpose.xlu0.b32.cont [5/16] 0.0, 128
  %177 = vxpose.xlu0.b32.cont [6/16] 0.0, 128
  %178 = vxpose.xlu0.b32.cont [7/16] 0.0, 128
  %179 = vxpose.xlu0.b32.cont [8/16] 0.0, 128
  %180 = vxpose.xlu0.b32.cont [9/16] 0.0, 128
  %181 = vxpose.xlu0.b32.cont [10/16] 0.0, 128
  %182 = vxpose.xlu0.b32.cont [11/16] 0.0, 128
  %183 = vxpose.xlu0.b32.cont [12/16] 0.0, 128
  %184 = vxpose.xlu0.b32.cont [13/16] 0.0, 128
  %185 = vxpose.xlu0.b32.cont [14/16] 0.0, 128
  %186 = vxpose.xlu0.b32.cont [15/16] 0.0, 128
  %187 = vxpose.xlu0.b32.end [16/16] 0.0, 128
  %v188 = vpop.trf.xlu0
  %v189 = vpop.trf.xlu0
  %v190 = vpop.trf.xlu0
  %v191 = vpop.trf.xlu0
  %v192 = vpop.trf.xlu0
  %v193 = vpop.trf.xlu0
  %v194 = vpop.trf.xlu0
  %v195 = vpop.trf.xlu0
  %v196 = vpop.trf.xlu0
  %v197 = vpop.trf.xlu0
  %v198 = vpop.trf.xlu0
  %v199 = vpop.trf.xlu0
  %v200 = vpop.trf.xlu0
  %v201 = vpop.trf.xlu0
  %v202 = vpop.trf.xlu0
  %v203 = vpop.trf.xlu0
  %vm204 = vcmask 253952
  %205 = vst.msk [vmem:[%s4] sm:$0x1] %vm204, %v188
  // Predicated region
  $region10: #{daegc_forward.7} parent=0 // pred_check
    _
  $region11: #{daegc_forward.7} parent=0 // pred_check_branch
    %207 = sbr.rel (0) target = $region13
  $region12: #{daegc_forward.7} parent=0 // pred_region
    _
  $region13: #{daegc_forward.7} parent=0 // pred_fallthru
    _
  // Predicated region
  $region14: #{daegc_forward.7} parent=0 // pred_check
    _
  $region15: #{daegc_forward.7} parent=0 // pred_check_branch
    %209 = sbr.rel (0) target = $region17
  $region16: #{daegc_forward.7} parent=0 // pred_region
    _
  $region17: #{daegc_forward.7} parent=0 // pred_fallthru
    _
  // Predicated region
  $region18: #{daegc_forward.7} parent=0 // pred_check
    _
  $region19: #{daegc_forward.7} parent=0 // pred_check_branch
    %211 = sbr.rel (0) target = $region21
  $region20: #{daegc_forward.7} parent=0 // pred_region
    _
  $region21: #{daegc_forward.7} parent=0 // pred_fallthru
    _
  // Predicated region
  $region22: #{daegc_forward.7} parent=0 // pred_check
    _
  $region23: #{daegc_forward.7} parent=0 // pred_check_branch
    %213 = sbr.rel (0) target = $region25
  $region24: #{daegc_forward.7} parent=0 // pred_region
    _
  $region25: #{daegc_forward.7} parent=0 // pred_fallthru
    _
  // Predicated region
  $region26: #{daegc_forward.7} parent=0 // pred_check
    _
  $region27: #{daegc_forward.7} parent=0 // pred_check_branch
    %215 = sbr.rel (0) target = $region29
  $region28: #{daegc_forward.7} parent=0 // pred_region
    _
  $region29: #{daegc_forward.7} parent=0 // pred_fallthru
    _
  // Predicated region
  $region30: #{daegc_forward.7} parent=0 // pred_check
    _
  $region31: #{daegc_forward.7} parent=0 // pred_check_branch
    %217 = sbr.rel (0) target = $region33
  $region32: #{daegc_forward.7} parent=0 // pred_region
    _
  $region33: #{daegc_forward.7} parent=0 // pred_fallthru
    _

// kernel: daegc_forward.8
$region0: #{daegc_forward.8}
  #allocation0 [shape = 'u32[]', space=smem, size = 0x4, offset = 0x4, fixed_abs, tag = 'smem constant byte address 0x4 - core index']
  #allocation1 [shape = 'u32[144,128]{1,0:T(1,128)}', space=vmem, size = 0x12000, scoped, tag = 'internal scratch']
  #allocation2 [shape = 'f32[32,1]{1,0:T(8,128)}', space=vmem, size = 0x4000, scoped, tag = 'scratch operand']
  #allocation3 [shape = 'f32[32,1]{1,0:T(8,128)}', space=vmem, size = 0x4000, scoped, tag = 'scratch operand']
  #allocation4 [shape = 'f32[32,32]{1,0:T(8,128)}', space=vmem, size = 0x4000, scoped, tag = 'scratch operand']
  %s0 = inlined_call_operand.vmem [shape: f32[32,1], index: 0, kind: input, shape index: {}]
  %s1 = inlined_call_operand.vmem [shape: f32[1,32], index: 1, kind: input, shape index: {}]
  %s2 = inlined_call_operand.vmem [shape: bf16[32,32], index: 2, kind: input, shape index: {}]
  %s3 = inlined_call_operand.vmem [shape: f32[32,32], index: 3, kind: input, shape index: {}]
  %s4 = inlined_call_operand.vmem [shape: f32[32,32], index: 4, kind: input, shape index: {}]
  %s5 = inlined_call_operand.vmem [shape: f32[32,32], index: 5, kind: output, shape index: {0}]
  %s6 = inlined_call_operand.vmem [shape: f32[32,32], index: 6, kind: output, shape index: {1}]
  %7 = xla_tuple %s5, %s6
  %s8 = sld [smem:[#allocation0]]
  $region46: #{daegc_forward.8} parent=0
    _
  %s10 = ssub.s32 1, %s8
  %s11 = scalar_select 0, %s10, %s8
  // Predicated region
  $region2: #{daegc_forward.8} parent=0 // pred_check
    _
  $region3: #{daegc_forward.8} parent=0 // pred_check_branch
    %13 = sbr.rel (0) target = $region5
  $region4: #{daegc_forward.8} parent=0 // pred_region
    _
  $region5: #{daegc_forward.8} parent=0 // pred_fallthru
    _
  // Predicated region
  $region6: #{daegc_forward.8} parent=0 // pred_check
    _
  $region7: #{daegc_forward.8} parent=0 // pred_check_branch
    %15 = sbr.rel (0) target = $region9
  $region8: #{daegc_forward.8} parent=0 // pred_region
    _
  $region9: #{daegc_forward.8} parent=0 // pred_fallthru
    _
  // Predicated region
  $region10: #{daegc_forward.8} parent=0 // pred_check
    _
  $region11: #{daegc_forward.8} parent=0 // pred_check_branch
    %17 = sbr.rel (0) target = $region13
  $region12: #{daegc_forward.8} parent=0 // pred_region
    _
  $region13: #{daegc_forward.8} parent=0 // pred_fallthru
    _
  // Predicated region
  $region14: #{daegc_forward.8} parent=0 // pred_check
    _
  $region15: #{daegc_forward.8} parent=0 // pred_check_branch
    %19 = sbr.rel (0) target = $region17
  $region16: #{daegc_forward.8} parent=0 // pred_region
    _
  $region17: #{daegc_forward.8} parent=0 // pred_fallthru
    _
  // Predicated region
  $region18: #{daegc_forward.8} parent=0 // pred_check
    _
  $region19: #{daegc_forward.8} parent=0 // pred_check_branch
    %21 = sbr.rel (0) target = $region21
  $region20: #{daegc_forward.8} parent=0 // pred_region
    _
  $region21: #{daegc_forward.8} parent=0 // pred_fallthru
    _
  %v23 = vld [vmem:[%s3] sm:$0xff]
  %v24 = vld [vmem:[%s3 + $0x8] sm:$0xff]
  %v25 = vld [vmem:[%s3 + $0x10] sm:$0xff]
  %v26 = vld [vmem:[%s3 + $0x18] sm:$0xff]
  %vm27 = vcmp.gt.f32.partialorder %v23, 0.0
  %vm28 = vcmp.gt.f32.partialorder %v24, 0.0
  %vm29 = vcmp.gt.f32.partialorder %v25, 0.0
  %vm30 = vcmp.gt.f32.partialorder %v26, 0.0
  %v31 = vld [vmem:[%s4] sm:$0xff]
  %v32 = vld [vmem:[%s4 + $0x8] sm:$0xff]
  %v33 = vld [vmem:[%s4 + $0x10] sm:$0xff]
  %v34 = vld [vmem:[%s4 + $0x18] sm:$0xff]
  %v35 = vsel %vm27, %v31, -1.0
  %v36 = vsel %vm28, %v32, -1.0
  %v37 = vsel %vm29, %v33, -1.0
  %v38 = vsel %vm30, %v34, -1.0
  %vm39 = vcmask 261120
  %40 = vst.msk [vmem:[%s6] sm:$0xff] %vm39, %v35
  %41 = vst.msk [vmem:[%s6 + $0x8] sm:$0xff] %vm39, %v36
  %42 = vst.msk [vmem:[%s6 + $0x10] sm:$0xff] %vm39, %v37
  %43 = vst.msk [vmem:[%s6 + $0x18] sm:$0xff] %vm39, %v38
  %p44 = scmp.eq.s32.totalorder 0, 0
  // Predicated region
  $region22: #{daegc_forward.8} parent=0 // pred_check
    %p45 = pneg %p44
  $region23: #{daegc_forward.8} parent=0 // pred_check_branch
    %47 = sbr.rel (%p45) target = $region25
  $region24: #{daegc_forward.8} parent=0 // pred_region
    %vm48 = vcmask 7168
    %49 = vst.msk [vmem:[#allocation2] sm:$0xff] %vm48, -inf
    %50 = vst.msk [vmem:[#allocation2 + $0x8] sm:$0xff] %vm48, -inf
    %51 = vst.msk [vmem:[#allocation2 + $0x10] sm:$0xff] %vm48, -inf
    %52 = vst.msk [vmem:[#allocation2 + $0x18] sm:$0xff] %vm48, -inf
    %53 = vst.msk [vmem:[#allocation3] sm:$0xff] %vm48, 0.0
    %54 = vst.msk [vmem:[#allocation3 + $0x8] sm:$0xff] %vm48, 0.0
    %55 = vst.msk [vmem:[#allocation3 + $0x10] sm:$0xff] %vm48, 0.0
    %56 = vst.msk [vmem:[#allocation3 + $0x18] sm:$0xff] %vm48, 0.0
    %57 = vst.msk [vmem:[#allocation4] sm:$0xff] %vm39, 0.0
    %58 = vst.msk [vmem:[#allocation4 + $0x8] sm:$0xff] %vm39, 0.0
    %59 = vst.msk [vmem:[#allocation4 + $0x10] sm:$0xff] %vm39, 0.0
    %60 = vst.msk [vmem:[#allocation4 + $0x18] sm:$0xff] %vm39, 0.0
  $region25: #{daegc_forward.8} parent=0 // pred_fallthru
    _
  %v61 = vld [vmem:[%s0] sm:$0xff]
  %v62 = vld [vmem:[%s0 + $0x8] sm:$0xff]
  %v63 = vld [vmem:[%s0 + $0x10] sm:$0xff]
  %v64 = vld [vmem:[%s0 + $0x18] sm:$0xff]
  %v65 = vld [vmem:[%s1] sm:$0x1]
  %67 = vset.pattern.permute.xlu0 0
  %68 = vperm.xlu0 %67, %v61
  %v69 = vpop.permute.xlu0 %68
  %72 = vset.pattern.permute.xlu0 0
  %73 = vperm.xlu0 %72, %v62
  %v74 = vpop.permute.xlu0 %73
  %77 = vset.pattern.permute.xlu0 0
  %78 = vperm.xlu0 %77, %v63
  %v79 = vpop.permute.xlu0 %78
  %82 = vset.pattern.permute.xlu0 0
  %83 = vperm.xlu0 %82, %v64
  %v84 = vpop.permute.xlu0 %83
  %v87 = vlaneseq
  %v88 = vshrl.u32 %v87, 7
  %v89 = vsub.s32 0, %v88
  %v90 = vrot.slane %v65, %v89
  %v92 = vadd.f32 %v69, %v90
  %v93 = vadd.f32 %v74, %v90
  %v94 = vadd.f32 %v79, %v90
  %v95 = vadd.f32 %v84, %v90
  %v96 = vmul.f32 %v92, %v35
  %v97 = vmul.f32 %v93, %v36
  %v98 = vmul.f32 %v94, %v37
  %v99 = vmul.f32 %v95, %v38
  %vm100 = vcmp.gt.f32.partialorder %v96, 0.0
  %vm101 = vcmp.gt.f32.partialorder %v97, 0.0
  %vm102 = vcmp.gt.f32.partialorder %v98, 0.0
  %vm103 = vcmp.gt.f32.partialorder %v99, 0.0
  %v104 = vmul.f32 %v96, 0.2
  %v105 = vmul.f32 %v97, 0.2
  %v106 = vmul.f32 %v98, 0.2
  %v107 = vmul.f32 %v99, 0.2
  %v108 = vsel %vm100, %v96, %v104
  %v109 = vsel %vm101, %v97, %v105
  %v110 = vsel %vm102, %v98, %v106
  %v111 = vsel %vm103, %v99, %v107
  %vm112 = vcmp.ge.f32.partialorder %v35, 0.0
  %vm113 = vcmp.ge.f32.partialorder %v36, 0.0
  %vm114 = vcmp.ge.f32.partialorder %v37, 0.0
  %vm115 = vcmp.ge.f32.partialorder %v38, 0.0
  %v116 = vsel %vm112, %v108, -9e+15
  %v117 = vsel %vm113, %v109, -9e+15
  %v118 = vsel %vm114, %v110, -9e+15
  %v119 = vsel %vm115, %v111, -9e+15
  %v120 = vld [vmem:[#allocation2] sm:$0xff]
  %v121 = vld [vmem:[#allocation2 + $0x8] sm:$0xff]
  %v122 = vld [vmem:[#allocation2 + $0x10] sm:$0xff]
  %v123 = vld [vmem:[#allocation2 + $0x18] sm:$0xff]
  %v124 = vsel %vm39, %v116, -inf
  %125 = vmax.xlane.f32.xlu0 %v124
  %v126 = vpop.xlane.xlu0 %125
  %v127 = vsel %vm39, %v117, -inf
  %128 = vmax.xlane.f32.xlu0 %v127
  %v129 = vpop.xlane.xlu0 %128
  %v130 = vsel %vm39, %v118, -inf
  %131 = vmax.xlane.f32.xlu0 %v130
  %v132 = vpop.xlane.xlu0 %131
  %v133 = vsel %vm39, %v119, -inf
  %134 = vmax.xlane.f32.xlu0 %v133
  %v135 = vpop.xlane.xlu0 %134
  %v136 = vmax.f32 %v120, %v126
  %v137 = vmax.f32 %v121, %v129
  %v138 = vmax.f32 %v122, %v132
  %v139 = vmax.f32 %v123, %v135
  %v140 = vsub.f32 %v120, %v136
  %v141 = vsub.f32 %v121, %v137
  %v142 = vsub.f32 %v122, %v138
  %v143 = vsub.f32 %v123, %v139
  %v144 = vmul.f32 %v140, 1.442695
  %v145 = vpow.pop %v144
  %v146 = vmul.f32 %v141, 1.442695
  %v147 = vpow.pop %v146
  %v148 = vmul.f32 %v142, 1.442695
  %v149 = vpow.pop %v148
  %v150 = vmul.f32 %v143, 1.442695
  %v151 = vpow.pop %v150
  %153 = vset.pattern.permute.xlu0 0
  %154 = vperm.xlu0 %153, %v136
  %v155 = vpop.permute.xlu0 %154
  %158 = vset.pattern.permute.xlu0 0
  %159 = vperm.xlu0 %158, %v137
  %v160 = vpop.permute.xlu0 %159
  %163 = vset.pattern.permute.xlu0 0
  %164 = vperm.xlu0 %163, %v138
  %v165 = vpop.permute.xlu0 %164
  %168 = vset.pattern.permute.xlu0 0
  %169 = vperm.xlu0 %168, %v139
  %v170 = vpop.permute.xlu0 %169
  %v172 = vsub.f32 %v116, %v155
  %v173 = vsub.f32 %v117, %v160
  %v174 = vsub.f32 %v118, %v165
  %v175 = vsub.f32 %v119, %v170
  %v176 = vmul.f32 %v172, 1.442695
  %v177 = vpow.pop %v176
  %v178 = vmul.f32 %v173, 1.442695
  %v179 = vpow.pop %v178
  %v180 = vmul.f32 %v174, 1.442695
  %v181 = vpow.pop %v180
  %v182 = vmul.f32 %v175, 1.442695
  %v183 = vpow.pop %v182
  %v184 = vld [vmem:[#allocation3] sm:$0xff]
  %v185 = vld [vmem:[#allocation3 + $0x8] sm:$0xff]
  %v186 = vld [vmem:[#allocation3 + $0x10] sm:$0xff]
  %v187 = vld [vmem:[#allocation3 + $0x18] sm:$0xff]
  %v188 = vmul.f32 %v145, %v184
  %v189 = vmul.f32 %v147, %v185
  %v190 = vmul.f32 %v149, %v186
  %v191 = vmul.f32 %v151, %v187
  %v192 = vsel %vm39, %v177, 0.0
  %193 = vadd.xlane.f32.xlu0 %v192
  %v194 = vpop.xlane.xlu0 %193
  %v195 = vsel %vm39, %v179, 0.0
  %196 = vadd.xlane.f32.xlu0 %v195
  %v197 = vpop.xlane.xlu0 %196
  %v198 = vsel %vm39, %v181, 0.0
  %199 = vadd.xlane.f32.xlu0 %v198
  %v200 = vpop.xlane.xlu0 %199
  %v201 = vsel %vm39, %v183, 0.0
  %202 = vadd.xlane.f32.xlu0 %v201
  %v203 = vpop.xlane.xlu0 %202
  %v204 = vadd.f32 %v188, %v194
  %v205 = vadd.f32 %v189, %v197
  %v206 = vadd.f32 %v190, %v200
  %v207 = vadd.f32 %v191, %v203
  %vm208 = vcmask 7168
  %209 = vst.msk [vmem:[#allocation3] sm:$0xff] %vm208, %v204
  %210 = vst.msk [vmem:[#allocation3 + $0x8] sm:$0xff] %vm208, %v205
  %211 = vst.msk [vmem:[#allocation3 + $0x10] sm:$0xff] %vm208, %v206
  %212 = vst.msk [vmem:[#allocation3 + $0x18] sm:$0xff] %vm208, %v207
  %v213 = vld [vmem:[#allocation4] sm:$0xff]
  %v214 = vld [vmem:[#allocation4 + $0x8] sm:$0xff]
  %v215 = vld [vmem:[#allocation4 + $0x10] sm:$0xff]
  %v216 = vld [vmem:[#allocation4 + $0x18] sm:$0xff]
  %218 = vset.pattern.permute.xlu0 0
  %219 = vperm.xlu0 %218, %v145
  %v220 = vpop.permute.xlu0 %219
  %223 = vset.pattern.permute.xlu0 0
  %224 = vperm.xlu0 %223, %v147
  %v225 = vpop.permute.xlu0 %224
  %228 = vset.pattern.permute.xlu0 0
  %229 = vperm.xlu0 %228, %v149
  %v230 = vpop.permute.xlu0 %229
  %233 = vset.pattern.permute.xlu0 0
  %234 = vperm.xlu0 %233, %v151
  %v235 = vpop.permute.xlu0 %234
  %v237 = vmul.f32 %v220, %v213
  %v238 = vmul.f32 %v225, %v214
  %v239 = vmul.f32 %v230, %v215
  %v240 = vmul.f32 %v235, %v216
  %v241 = vpack.c.bf16 %v179, %v177
  %v242 = vpack.c.bf16 %v183, %v181
  %v243 = vld [vmem:[%s2] sm:$0xf]
  %v244 = vld [vmem:[%s2 + $0x4] sm:$0xf]
  %v245 = vld [vmem:[%s2 + $0x8] sm:$0xf]
  %v246 = vld [vmem:[%s2 + $0xc] sm:$0xf]
  %v251 = vunpack.c.l.b16 %v243
  %v252 = vunpack.c.l.b16 %v244
  %v253 = vunpack.c.l.b16 %v245
  %v254 = vunpack.c.l.b16 %v246
  %v255 = vpack.c.b16 %v252, %v251
  %v256 = vpack.c.b16 %v254, %v253
  %v260 = vsel %vm39, %v241, 0
  %v263 = vsel %vm39, %v242, 0
  %265 = vmatprep.subr.bf16.mxu0 0
  %266 = vmatpush1.bf16.msra.mxu0 %v255
  %267 = vmatprep.subr.bf16.mxu0 0
  %268 = vmatpush1.bf16.msra.mxu0 %v256
  %269 = vmatprep.subr.bf16.mxu0 0
  %270 = vmatpush1.bf16.msra.mxu0 0
  %271 = vmatprep.subr.bf16.mxu0 0
  %272 = vmatpush1.bf16.msra.mxu0 0
  %273 = vmatprep.subr.bf16.mxu0 0
  %274 = vmatpush1.bf16.msra.mxu0 0
  %275 = vmatprep.subr.bf16.mxu0 0
  %276 = vmatpush1.bf16.msra.mxu0 0
  %277 = vmatprep.subr.bf16.mxu0 0
  %278 = vmatpush1.bf16.msra.mxu0 0
  %279 = vmatprep.subr.bf16.mxu0 0
  %280 = vmatpush1.bf16.msra.mxu0 0
  %281 = vmatprep.subr.bf16.mxu0 0
  %282 = vmatpush1.bf16.msra.mxu0 0
  %283 = vmatprep.subr.bf16.mxu0 0
  %284 = vmatpush1.bf16.msra.mxu0 0
  %285 = vmatprep.subr.bf16.mxu0 0
  %286 = vmatpush1.bf16.msra.mxu0 0
  %287 = vmatprep.subr.bf16.mxu0 0
  %288 = vmatpush1.bf16.msra.mxu0 0
  %289 = vmatprep.subr.bf16.mxu0 0
  %290 = vmatpush1.bf16.msra.mxu0 0
  %291 = vmatprep.subr.bf16.mxu0 0
  %292 = vmatpush1.bf16.msra.mxu0 0
  %293 = vmatprep.subr.bf16.mxu0 0
  %294 = vmatpush1.bf16.msra.mxu0 0
  %295 = vmatprep.subr.bf16.mxu0 0
  %296 = vmatpush1.bf16.msra.mxu0 0
  %297 = vmatprep.mubr.bf16.mxu0 0
  %298 = vmatmul.mubr.bf16.gmra.mrb[0].mxu0 %v260
  %v299 = vpop.f32.mrb[0].mxu0
  %v300 = vadd.f32 0.0, %v299
  %v301 = vpop.f32.mrb[0].mxu0
  %v302 = vpop.f32.mrb[0].mxu0
  %v303 = vadd.f32 0.0, %v302
  %v304 = vpop.f32.mrb[0].mxu0
  %305 = vmatprep.mubr.bf16.mxu0 0
  %306 = vmatmul.mubr.bf16.gmra.mrb[0].mxu0 %v263
  %v307 = vpop.f32.mrb[0].mxu0
  %v308 = vadd.f32 0.0, %v307
  %v309 = vpop.f32.mrb[0].mxu0
  %v310 = vpop.f32.mrb[0].mxu0
  %v311 = vadd.f32 0.0, %v310
  %v312 = vpop.f32.mrb[0].mxu0
  %313 = vdwg.mxu0
  %v314 = vadd.f32 %v237, %v300
  %v315 = vadd.f32 %v238, %v303
  %v316 = vadd.f32 %v239, %v308
  %v317 = vadd.f32 %v240, %v311
  %318 = vst.msk [vmem:[#allocation4] sm:$0xff] %vm39, %v314
  %319 = vst.msk [vmem:[#allocation4 + $0x8] sm:$0xff] %vm39, %v315
  %320 = vst.msk [vmem:[#allocation4 + $0x10] sm:$0xff] %vm39, %v316
  %321 = vst.msk [vmem:[#allocation4 + $0x18] sm:$0xff] %vm39, %v317
  %322 = vst.msk [vmem:[#allocation2] sm:$0xff] %vm208, %v136
  %323 = vst.msk [vmem:[#allocation2 + $0x8] sm:$0xff] %vm208, %v137
  %324 = vst.msk [vmem:[#allocation2 + $0x10] sm:$0xff] %vm208, %v138
  %325 = vst.msk [vmem:[#allocation2 + $0x18] sm:$0xff] %vm208, %v139
  // Predicated region
  $region26: #{daegc_forward.8} parent=0 // pred_check
    %p326 = pneg %p44
  $region27: #{daegc_forward.8} parent=0 // pred_check_branch
    %328 = sbr.rel (%p326) target = $region29
  $region28: #{daegc_forward.8} parent=0 // pred_region
    %v329 = vld [vmem:[#allocation4] sm:$0xff]
    %v330 = vld [vmem:[#allocation4 + $0x8] sm:$0xff]
    %v331 = vld [vmem:[#allocation4 + $0x10] sm:$0xff]
    %v332 = vld [vmem:[#allocation4 + $0x18] sm:$0xff]
    %v333 = vld [vmem:[#allocation3] sm:$0xff]
    %v334 = vld [vmem:[#allocation3 + $0x8] sm:$0xff]
    %v335 = vld [vmem:[#allocation3 + $0x10] sm:$0xff]
    %v336 = vld [vmem:[#allocation3 + $0x18] sm:$0xff]
    %v337 = vrcp.pop %v333
    %v338 = vrcp.pop %v334
    %v339 = vrcp.pop %v335
    %v340 = vrcp.pop %v336
    %342 = vset.pattern.permute.xlu0 0
    %343 = vperm.xlu0 %342, %v337
    %v344 = vpop.permute.xlu0 %343
    %347 = vset.pattern.permute.xlu0 0
    %348 = vperm.xlu0 %347, %v338
    %v349 = vpop.permute.xlu0 %348
    %352 = vset.pattern.permute.xlu0 0
    %353 = vperm.xlu0 %352, %v339
    %v354 = vpop.permute.xlu0 %353
    %357 = vset.pattern.permute.xlu0 0
    %358 = vperm.xlu0 %357, %v340
    %v359 = vpop.permute.xlu0 %358
    %v361 = vmul.f32 %v329, %v344
    %v362 = vmul.f32 %v330, %v349
    %v363 = vmul.f32 %v331, %v354
    %v364 = vmul.f32 %v332, %v359
    %vm365 = vcmp.gt.f32.partialorder %v361, 0.0
    %vm366 = vcmp.gt.f32.partialorder %v362, 0.0
    %vm367 = vcmp.gt.f32.partialorder %v363, 0.0
    %vm368 = vcmp.gt.f32.partialorder %v364, 0.0
    %v369 = vmin.f32 %v361, 0.0
    %v370 = vmin.f32 %v362, 0.0
    %v371 = vmin.f32 %v363, 0.0
    %v372 = vmin.f32 %v364, 0.0
    %v373 = vmul.f32 %v369, 1.442695
    %v374 = vpow.pop %v373
    %v375 = vmul.f32 %v370, 1.442695
    %v376 = vpow.pop %v375
    %v377 = vmul.f32 %v371, 1.442695
    %v378 = vpow.pop %v377
    %v379 = vmul.f32 %v372, 1.442695
    %v380 = vpow.pop %v379
    %v381 = vsub.f32 %v374, 1.0
    %v382 = vsub.f32 %v376, 1.0
    %v383 = vsub.f32 %v378, 1.0
    %v384 = vsub.f32 %v380, 1.0
    %v385 = vsel %vm365, %v361, %v381
    %v386 = vsel %vm366, %v362, %v382
    %v387 = vsel %vm367, %v363, %v383
    %v388 = vsel %vm368, %v364, %v384
    %389 = vst.msk [vmem:[%s5] sm:$0xff] %vm39, %v385
    %390 = vst.msk [vmem:[%s5 + $0x8] sm:$0xff] %vm39, %v386
    %391 = vst.msk [vmem:[%s5 + $0x10] sm:$0xff] %vm39, %v387
    %392 = vst.msk [vmem:[%s5 + $0x18] sm:$0xff] %vm39, %v388
  $region29: #{daegc_forward.8} parent=0 // pred_fallthru
    _
  // Predicated region
  $region30: #{daegc_forward.8} parent=0 // pred_check
    _
  $region31: #{daegc_forward.8} parent=0 // pred_check_branch
    %394 = sbr.rel (0) target = $region33
  $region32: #{daegc_forward.8} parent=0 // pred_region
    _
  $region33: #{daegc_forward.8} parent=0 // pred_fallthru
    _
  // Predicated region
  $region34: #{daegc_forward.8} parent=0 // pred_check
    _
  $region35: #{daegc_forward.8} parent=0 // pred_check_branch
    %396 = sbr.rel (0) target = $region37
  $region36: #{daegc_forward.8} parent=0 // pred_region
    _
  $region37: #{daegc_forward.8} parent=0 // pred_fallthru
    _
  // Predicated region
  $region38: #{daegc_forward.8} parent=0 // pred_check
    _
  $region39: #{daegc_forward.8} parent=0 // pred_check_branch
    %398 = sbr.rel (0) target = $region41
  $region40: #{daegc_forward.8} parent=0 // pred_region
    _
  $region41: #{daegc_forward.8} parent=0 // pred_fallthru
    _
  // Predicated region
  $region42: #{daegc_forward.8} parent=0 // pred_check
    _
  $region43: #{daegc_forward.8} parent=0 // pred_check_branch
    %400 = sbr.rel (0) target = $region45
  $region44: #{daegc_forward.8} parent=0 // pred_region
    _
  $region45: #{daegc_forward.8} parent=0 // pred_fallthru
    _

// kernel: daegc_forward.10
$region0: #{daegc_forward.10}
  #allocation0 [shape = 'u32[]', space=smem, size = 0x4, offset = 0x4, fixed_abs, tag = 'smem constant byte address 0x4 - core index']
  #allocation1 [shape = 'u32[144,128]{1,0:T(1,128)}', space=vmem, size = 0x12000, scoped, tag = 'internal scratch']
  #allocation2 [shape = 'f32[32,1]{1,0:T(8,128)}', space=vmem, size = 0x4000, scoped, tag = 'scratch operand']
  #allocation3 [shape = 'f32[32,1]{1,0:T(8,128)}', space=vmem, size = 0x4000, scoped, tag = 'scratch operand']
  #allocation4 [shape = 'f32[32,16]{1,0:T(8,128)}', space=vmem, size = 0x4000, scoped, tag = 'scratch operand']
  %s0 = inlined_call_operand.vmem [shape: f32[32,1], index: 0, kind: input, shape index: {}]
  %s1 = inlined_call_operand.vmem [shape: f32[1,32], index: 1, kind: input, shape index: {}]
  %s2 = inlined_call_operand.vmem [shape: bf16[32,16], index: 2, kind: input, shape index: {}]
  %s3 = inlined_call_operand.vmem [shape: f32[32,32], index: 3, kind: input, shape index: {}]
  %s4 = inlined_call_operand.vmem [shape: f32[32,16], index: 4, kind: output, shape index: {}]
  %s5 = sld [smem:[#allocation0]]
  $region34: #{daegc_forward.10} parent=0
    _
  %s7 = ssub.s32 1, %s5
  %s8 = scalar_select 0, %s7, %s5
  // Predicated region
  $region2: #{daegc_forward.10} parent=0 // pred_check
    _
  $region3: #{daegc_forward.10} parent=0 // pred_check_branch
    %10 = sbr.rel (0) target = $region5
  $region4: #{daegc_forward.10} parent=0 // pred_region
    _
  $region5: #{daegc_forward.10} parent=0 // pred_fallthru
    _
  // Predicated region
  $region6: #{daegc_forward.10} parent=0 // pred_check
    _
  $region7: #{daegc_forward.10} parent=0 // pred_check_branch
    %12 = sbr.rel (0) target = $region9
  $region8: #{daegc_forward.10} parent=0 // pred_region
    _
  $region9: #{daegc_forward.10} parent=0 // pred_fallthru
    _
  // Predicated region
  $region10: #{daegc_forward.10} parent=0 // pred_check
    _
  $region11: #{daegc_forward.10} parent=0 // pred_check_branch
    %14 = sbr.rel (0) target = $region13
  $region12: #{daegc_forward.10} parent=0 // pred_region
    _
  $region13: #{daegc_forward.10} parent=0 // pred_fallthru
    _
  // Predicated region
  $region14: #{daegc_forward.10} parent=0 // pred_check
    _
  $region15: #{daegc_forward.10} parent=0 // pred_check_branch
    %16 = sbr.rel (0) target = $region17
  $region16: #{daegc_forward.10} parent=0 // pred_region
    _
  $region17: #{daegc_forward.10} parent=0 // pred_fallthru
    _
  %v18 = vld [vmem:[%s3] sm:$0xff]
  %v19 = vld [vmem:[%s3 + $0x8] sm:$0xff]
  %v20 = vld [vmem:[%s3 + $0x10] sm:$0xff]
  %v21 = vld [vmem:[%s3 + $0x18] sm:$0xff]
  %p22 = scmp.eq.s32.totalorder 0, 0
  // Predicated region
  $region18: #{daegc_forward.10} parent=0 // pred_check
    %p23 = pneg %p22
  $region19: #{daegc_forward.10} parent=0 // pred_check_branch
    %25 = sbr.rel (%p23) target = $region21
  $region20: #{daegc_forward.10} parent=0 // pred_region
    %vm26 = vcmask 7168
    %27 = vst.msk [vmem:[#allocation2] sm:$0xff] %vm26, -inf
    %28 = vst.msk [vmem:[#allocation2 + $0x8] sm:$0xff] %vm26, -inf
    %29 = vst.msk [vmem:[#allocation2 + $0x10] sm:$0xff] %vm26, -inf
    %30 = vst.msk [vmem:[#allocation2 + $0x18] sm:$0xff] %vm26, -inf
    %31 = vst.msk [vmem:[#allocation3] sm:$0xff] %vm26, 0.0
    %32 = vst.msk [vmem:[#allocation3 + $0x8] sm:$0xff] %vm26, 0.0
    %33 = vst.msk [vmem:[#allocation3 + $0x10] sm:$0xff] %vm26, 0.0
    %34 = vst.msk [vmem:[#allocation3 + $0x18] sm:$0xff] %vm26, 0.0
    %vm35 = vcmask 130048
    %36 = vst.msk [vmem:[#allocation4] sm:$0xff] %vm35, 0.0
    %37 = vst.msk [vmem:[#allocation4 + $0x8] sm:$0xff] %vm35, 0.0
    %38 = vst.msk [vmem:[#allocation4 + $0x10] sm:$0xff] %vm35, 0.0
    %39 = vst.msk [vmem:[#allocation4 + $0x18] sm:$0xff] %vm35, 0.0
  $region21: #{daegc_forward.10} parent=0 // pred_fallthru
    _
  %v40 = vld [vmem:[%s0] sm:$0xff]
  %v41 = vld [vmem:[%s0 + $0x8] sm:$0xff]
  %v42 = vld [vmem:[%s0 + $0x10] sm:$0xff]
  %v43 = vld [vmem:[%s0 + $0x18] sm:$0xff]
  %v44 = vld [vmem:[%s1] sm:$0x1]
  %46 = vset.pattern.permute.xlu0 0
  %47 = vperm.xlu0 %46, %v40
  %v48 = vpop.permute.xlu0 %47
  %51 = vset.pattern.permute.xlu0 0
  %52 = vperm.xlu0 %51, %v41
  %v53 = vpop.permute.xlu0 %52
  %56 = vset.pattern.permute.xlu0 0
  %57 = vperm.xlu0 %56, %v42
  %v58 = vpop.permute.xlu0 %57
  %61 = vset.pattern.permute.xlu0 0
  %62 = vperm.xlu0 %61, %v43
  %v63 = vpop.permute.xlu0 %62
  %v66 = vlaneseq
  %v67 = vshrl.u32 %v66, 7
  %v68 = vsub.s32 0, %v67
  %v69 = vrot.slane %v44, %v68
  %v71 = vadd.f32 %v48, %v69
  %v72 = vadd.f32 %v53, %v69
  %v73 = vadd.f32 %v58, %v69
  %v74 = vadd.f32 %v63, %v69
  %v75 = vmul.f32 %v71, %v18
  %v76 = vmul.f32 %v72, %v19
  %v77 = vmul.f32 %v73, %v20
  %v78 = vmul.f32 %v74, %v21
  %vm79 = vcmp.gt.f32.partialorder %v75, 0.0
  %vm80 = vcmp.gt.f32.partialorder %v76, 0.0
  %vm81 = vcmp.gt.f32.partialorder %v77, 0.0
  %vm82 = vcmp.gt.f32.partialorder %v78, 0.0
  %v83 = vmul.f32 %v75, 0.2
  %v84 = vmul.f32 %v76, 0.2
  %v85 = vmul.f32 %v77, 0.2
  %v86 = vmul.f32 %v78, 0.2
  %v87 = vsel %vm79, %v75, %v83
  %v88 = vsel %vm80, %v76, %v84
  %v89 = vsel %vm81, %v77, %v85
  %v90 = vsel %vm82, %v78, %v86
  %vm91 = vcmp.ge.f32.partialorder %v18, 0.0
  %vm92 = vcmp.ge.f32.partialorder %v19, 0.0
  %vm93 = vcmp.ge.f32.partialorder %v20, 0.0
  %vm94 = vcmp.ge.f32.partialorder %v21, 0.0
  %v95 = vsel %vm91, %v87, -9e+15
  %v96 = vsel %vm92, %v88, -9e+15
  %v97 = vsel %vm93, %v89, -9e+15
  %v98 = vsel %vm94, %v90, -9e+15
  %v99 = vld [vmem:[#allocation2] sm:$0xff]
  %v100 = vld [vmem:[#allocation2 + $0x8] sm:$0xff]
  %v101 = vld [vmem:[#allocation2 + $0x10] sm:$0xff]
  %v102 = vld [vmem:[#allocation2 + $0x18] sm:$0xff]
  %vm103 = vcmask 261120
  %v104 = vsel %vm103, %v95, -inf
  %105 = vmax.xlane.f32.xlu0 %v104
  %v106 = vpop.xlane.xlu0 %105
  %v107 = vsel %vm103, %v96, -inf
  %108 = vmax.xlane.f32.xlu0 %v107
  %v109 = vpop.xlane.xlu0 %108
  %v110 = vsel %vm103, %v97, -inf
  %111 = vmax.xlane.f32.xlu0 %v110
  %v112 = vpop.xlane.xlu0 %111
  %v113 = vsel %vm103, %v98, -inf
  %114 = vmax.xlane.f32.xlu0 %v113
  %v115 = vpop.xlane.xlu0 %114
  %v116 = vmax.f32 %v99, %v106
  %v117 = vmax.f32 %v100, %v109
  %v118 = vmax.f32 %v101, %v112
  %v119 = vmax.f32 %v102, %v115
  %v120 = vsub.f32 %v99, %v116
  %v121 = vsub.f32 %v100, %v117
  %v122 = vsub.f32 %v101, %v118
  %v123 = vsub.f32 %v102, %v119
  %v124 = vmul.f32 %v120, 1.442695
  %v125 = vpow.pop %v124
  %v126 = vmul.f32 %v121, 1.442695
  %v127 = vpow.pop %v126
  %v128 = vmul.f32 %v122, 1.442695
  %v129 = vpow.pop %v128
  %v130 = vmul.f32 %v123, 1.442695
  %v131 = vpow.pop %v130
  %133 = vset.pattern.permute.xlu0 0
  %134 = vperm.xlu0 %133, %v116
  %v135 = vpop.permute.xlu0 %134
  %138 = vset.pattern.permute.xlu0 0
  %139 = vperm.xlu0 %138, %v117
  %v140 = vpop.permute.xlu0 %139
  %143 = vset.pattern.permute.xlu0 0
  %144 = vperm.xlu0 %143, %v118
  %v145 = vpop.permute.xlu0 %144
  %148 = vset.pattern.permute.xlu0 0
  %149 = vperm.xlu0 %148, %v119
  %v150 = vpop.permute.xlu0 %149
  %v152 = vsub.f32 %v95, %v135
  %v153 = vsub.f32 %v96, %v140
  %v154 = vsub.f32 %v97, %v145
  %v155 = vsub.f32 %v98, %v150
  %v156 = vmul.f32 %v152, 1.442695
  %v157 = vpow.pop %v156
  %v158 = vmul.f32 %v153, 1.442695
  %v159 = vpow.pop %v158
  %v160 = vmul.f32 %v154, 1.442695
  %v161 = vpow.pop %v160
  %v162 = vmul.f32 %v155, 1.442695
  %v163 = vpow.pop %v162
  %v164 = vld [vmem:[#allocation3] sm:$0xff]
  %v165 = vld [vmem:[#allocation3 + $0x8] sm:$0xff]
  %v166 = vld [vmem:[#allocation3 + $0x10] sm:$0xff]
  %v167 = vld [vmem:[#allocation3 + $0x18] sm:$0xff]
  %v168 = vmul.f32 %v125, %v164
  %v169 = vmul.f32 %v127, %v165
  %v170 = vmul.f32 %v129, %v166
  %v171 = vmul.f32 %v131, %v167
  %v172 = vsel %vm103, %v157, 0.0
  %173 = vadd.xlane.f32.xlu0 %v172
  %v174 = vpop.xlane.xlu0 %173
  %v175 = vsel %vm103, %v159, 0.0
  %176 = vadd.xlane.f32.xlu0 %v175
  %v177 = vpop.xlane.xlu0 %176
  %v178 = vsel %vm103, %v161, 0.0
  %179 = vadd.xlane.f32.xlu0 %v178
  %v180 = vpop.xlane.xlu0 %179
  %v181 = vsel %vm103, %v163, 0.0
  %182 = vadd.xlane.f32.xlu0 %v181
  %v183 = vpop.xlane.xlu0 %182
  %v184 = vadd.f32 %v168, %v174
  %v185 = vadd.f32 %v169, %v177
  %v186 = vadd.f32 %v170, %v180
  %v187 = vadd.f32 %v171, %v183
  %vm188 = vcmask 7168
  %189 = vst.msk [vmem:[#allocation3] sm:$0xff] %vm188, %v184
  %190 = vst.msk [vmem:[#allocation3 + $0x8] sm:$0xff] %vm188, %v185
  %191 = vst.msk [vmem:[#allocation3 + $0x10] sm:$0xff] %vm188, %v186
  %192 = vst.msk [vmem:[#allocation3 + $0x18] sm:$0xff] %vm188, %v187
  %v193 = vld [vmem:[#allocation4] sm:$0xff]
  %v194 = vld [vmem:[#allocation4 + $0x8] sm:$0xff]
  %v195 = vld [vmem:[#allocation4 + $0x10] sm:$0xff]
  %v196 = vld [vmem:[#allocation4 + $0x18] sm:$0xff]
  %198 = vset.pattern.permute.xlu0 0
  %199 = vperm.xlu0 %198, %v125
  %v200 = vpop.permute.xlu0 %199
  %203 = vset.pattern.permute.xlu0 0
  %204 = vperm.xlu0 %203, %v127
  %v205 = vpop.permute.xlu0 %204
  %208 = vset.pattern.permute.xlu0 0
  %209 = vperm.xlu0 %208, %v129
  %v210 = vpop.permute.xlu0 %209
  %213 = vset.pattern.permute.xlu0 0
  %214 = vperm.xlu0 %213, %v131
  %v215 = vpop.permute.xlu0 %214
  %v217 = vmul.f32 %v200, %v193
  %v218 = vmul.f32 %v205, %v194
  %v219 = vmul.f32 %v210, %v195
  %v220 = vmul.f32 %v215, %v196
  %v221 = vpack.c.bf16 %v159, %v157
  %v222 = vpack.c.bf16 %v163, %v161
  %v223 = vld [vmem:[%s2] sm:$0xf]
  %v224 = vld [vmem:[%s2 + $0x4] sm:$0xf]
  %v225 = vld [vmem:[%s2 + $0x8] sm:$0xf]
  %v226 = vld [vmem:[%s2 + $0xc] sm:$0xf]
  %v231 = vunpack.c.l.b16 %v223
  %v232 = vunpack.c.l.b16 %v224
  %v233 = vunpack.c.l.b16 %v225
  %v234 = vunpack.c.l.b16 %v226
  %v235 = vpack.c.b16 %v232, %v231
  %v236 = vpack.c.b16 %v234, %v233
  %v240 = vsel %vm103, %v221, 0
  %v243 = vsel %vm103, %v222, 0
  %245 = vmatprep.subr.bf16.mxu0 0
  %246 = vmatpush1.bf16.msra.mxu0 %v235
  %247 = vmatprep.subr.bf16.mxu0 0
  %248 = vmatpush1.bf16.msra.mxu0 %v236
  %249 = vmatprep.subr.bf16.mxu0 0
  %250 = vmatpush1.bf16.msra.mxu0 0
  %251 = vmatprep.subr.bf16.mxu0 0
  %252 = vmatpush1.bf16.msra.mxu0 0
  %253 = vmatprep.subr.bf16.mxu0 0
  %254 = vmatpush1.bf16.msra.mxu0 0
  %255 = vmatprep.subr.bf16.mxu0 0
  %256 = vmatpush1.bf16.msra.mxu0 0
  %257 = vmatprep.subr.bf16.mxu0 0
  %258 = vmatpush1.bf16.msra.mxu0 0
  %259 = vmatprep.subr.bf16.mxu0 0
  %260 = vmatpush1.bf16.msra.mxu0 0
  %261 = vmatprep.subr.bf16.mxu0 0
  %262 = vmatpush1.bf16.msra.mxu0 0
  %263 = vmatprep.subr.bf16.mxu0 0
  %264 = vmatpush1.bf16.msra.mxu0 0
  %265 = vmatprep.subr.bf16.mxu0 0
  %266 = vmatpush1.bf16.msra.mxu0 0
  %267 = vmatprep.subr.bf16.mxu0 0
  %268 = vmatpush1.bf16.msra.mxu0 0
  %269 = vmatprep.subr.bf16.mxu0 0
  %270 = vmatpush1.bf16.msra.mxu0 0
  %271 = vmatprep.subr.bf16.mxu0 0
  %272 = vmatpush1.bf16.msra.mxu0 0
  %273 = vmatprep.subr.bf16.mxu0 0
  %274 = vmatpush1.bf16.msra.mxu0 0
  %275 = vmatprep.subr.bf16.mxu0 0
  %276 = vmatpush1.bf16.msra.mxu0 0
  %277 = vmatprep.mubr.bf16.mxu0 0
  %278 = vmatmul.mubr.bf16.gmra.mrb[0].mxu0 %v240
  %v279 = vpop.f32.mrb[0].mxu0
  %v280 = vadd.f32 0.0, %v279
  %v281 = vpop.f32.mrb[0].mxu0
  %v282 = vpop.f32.mrb[0].mxu0
  %v283 = vadd.f32 0.0, %v282
  %v284 = vpop.f32.mrb[0].mxu0
  %285 = vmatprep.mubr.bf16.mxu0 0
  %286 = vmatmul.mubr.bf16.gmra.mrb[0].mxu0 %v243
  %v287 = vpop.f32.mrb[0].mxu0
  %v288 = vadd.f32 0.0, %v287
  %v289 = vpop.f32.mrb[0].mxu0
  %v290 = vpop.f32.mrb[0].mxu0
  %v291 = vadd.f32 0.0, %v290
  %v292 = vpop.f32.mrb[0].mxu0
  %293 = vdwg.mxu0
  %v294 = vadd.f32 %v217, %v280
  %v295 = vadd.f32 %v218, %v283
  %v296 = vadd.f32 %v219, %v288
  %v297 = vadd.f32 %v220, %v291
  %vm298 = vcmask 130048
  %299 = vst.msk [vmem:[#allocation4] sm:$0xff] %vm298, %v294
  %300 = vst.msk [vmem:[#allocation4 + $0x8] sm:$0xff] %vm298, %v295
  %301 = vst.msk [vmem:[#allocation4 + $0x10] sm:$0xff] %vm298, %v296
  %302 = vst.msk [vmem:[#allocation4 + $0x18] sm:$0xff] %vm298, %v297
  %303 = vst.msk [vmem:[#allocation2] sm:$0xff] %vm188, %v116
  %304 = vst.msk [vmem:[#allocation2 + $0x8] sm:$0xff] %vm188, %v117
  %305 = vst.msk [vmem:[#allocation2 + $0x10] sm:$0xff] %vm188, %v118
  %306 = vst.msk [vmem:[#allocation2 + $0x18] sm:$0xff] %vm188, %v119
  // Predicated region
  $region22: #{daegc_forward.10} parent=0 // pred_check
    %p307 = pneg %p22
  $region23: #{daegc_forward.10} parent=0 // pred_check_branch
    %309 = sbr.rel (%p307) target = $region25
  $region24: #{daegc_forward.10} parent=0 // pred_region
    %v310 = vld [vmem:[#allocation4] sm:$0xff]
    %v311 = vld [vmem:[#allocation4 + $0x8] sm:$0xff]
    %v312 = vld [vmem:[#allocation4 + $0x10] sm:$0xff]
    %v313 = vld [vmem:[#allocation4 + $0x18] sm:$0xff]
    %v314 = vld [vmem:[#allocation3] sm:$0xff]
    %v315 = vld [vmem:[#allocation3 + $0x8] sm:$0xff]
    %v316 = vld [vmem:[#allocation3 + $0x10] sm:$0xff]
    %v317 = vld [vmem:[#allocation3 + $0x18] sm:$0xff]
    %v318 = vrcp.pop %v314
    %v319 = vrcp.pop %v315
    %v320 = vrcp.pop %v316
    %v321 = vrcp.pop %v317
    %323 = vset.pattern.permute.xlu0 0
    %324 = vperm.xlu0 %323, %v318
    %v325 = vpop.permute.xlu0 %324
    %328 = vset.pattern.permute.xlu0 0
    %329 = vperm.xlu0 %328, %v319
    %v330 = vpop.permute.xlu0 %329
    %333 = vset.pattern.permute.xlu0 0
    %334 = vperm.xlu0 %333, %v320
    %v335 = vpop.permute.xlu0 %334
    %338 = vset.pattern.permute.xlu0 0
    %339 = vperm.xlu0 %338, %v321
    %v340 = vpop.permute.xlu0 %339
    %v342 = vmul.f32 %v310, %v325
    %v343 = vmul.f32 %v311, %v330
    %v344 = vmul.f32 %v312, %v335
    %v345 = vmul.f32 %v313, %v340
    %vm346 = vcmp.gt.f32.partialorder %v342, 0.0
    %vm347 = vcmp.gt.f32.partialorder %v343, 0.0
    %vm348 = vcmp.gt.f32.partialorder %v344, 0.0
    %vm349 = vcmp.gt.f32.partialorder %v345, 0.0
    %v350 = vmin.f32 %v342, 0.0
    %v351 = vmin.f32 %v343, 0.0
    %v352 = vmin.f32 %v344, 0.0
    %v353 = vmin.f32 %v345, 0.0
    %v354 = vmul.f32 %v350, 1.442695
    %v355 = vpow.pop %v354
    %v356 = vmul.f32 %v351, 1.442695
    %v357 = vpow.pop %v356
    %v358 = vmul.f32 %v352, 1.442695
    %v359 = vpow.pop %v358
    %v360 = vmul.f32 %v353, 1.442695
    %v361 = vpow.pop %v360
    %v362 = vsub.f32 %v355, 1.0
    %v363 = vsub.f32 %v357, 1.0
    %v364 = vsub.f32 %v359, 1.0
    %v365 = vsub.f32 %v361, 1.0
    %v366 = vsel %vm346, %v342, %v362
    %v367 = vsel %vm347, %v343, %v363
    %v368 = vsel %vm348, %v344, %v364
    %v369 = vsel %vm349, %v345, %v365
    %v370 = vmul.f32 %v366, %v366
    %v371 = vmul.f32 %v367, %v367
    %v372 = vmul.f32 %v368, %v368
    %v373 = vmul.f32 %v369, %v369
    %v374 = vsel %vm298, %v370, 0.0
    %375 = vadd.xlane.f32.xlu0 %v374
    %v376 = vpop.xlane.xlu0 %375
    %v377 = vsel %vm298, %v371, 0.0
    %378 = vadd.xlane.f32.xlu0 %v377
    %v379 = vpop.xlane.xlu0 %378
    %v380 = vsel %vm298, %v372, 0.0
    %381 = vadd.xlane.f32.xlu0 %v380
    %v382 = vpop.xlane.xlu0 %381
    %v383 = vsel %vm298, %v373, 0.0
    %384 = vadd.xlane.f32.xlu0 %v383
    %v385 = vpop.xlane.xlu0 %384
    %v386 = vmax.f32 %v376, 1e-24
    %v387 = vmax.f32 %v379, 1e-24
    %v388 = vmax.f32 %v382, 1e-24
    %v389 = vmax.f32 %v385, 1e-24
    %v390 = vrsqrt.pop %v386
    %v391 = vrsqrt.pop %v387
    %v392 = vrsqrt.pop %v388
    %v393 = vrsqrt.pop %v389
    %v394 = vmul.f32 %v366, %v390
    %v395 = vmul.f32 %v367, %v391
    %v396 = vmul.f32 %v368, %v392
    %v397 = vmul.f32 %v369, %v393
    %398 = vst.msk [vmem:[%s4] sm:$0xff] %vm298, %v394
    %399 = vst.msk [vmem:[%s4 + $0x8] sm:$0xff] %vm298, %v395
    %400 = vst.msk [vmem:[%s4 + $0x10] sm:$0xff] %vm298, %v396
    %401 = vst.msk [vmem:[%s4 + $0x18] sm:$0xff] %vm298, %v397
  $region25: #{daegc_forward.10} parent=0 // pred_fallthru
    _
  // Predicated region
  $region26: #{daegc_forward.10} parent=0 // pred_check
    _
  $region27: #{daegc_forward.10} parent=0 // pred_check_branch
    %403 = sbr.rel (0) target = $region29
  $region28: #{daegc_forward.10} parent=0 // pred_region
    _
  $region29: #{daegc_forward.10} parent=0 // pred_fallthru
    _
  // Predicated region
  $region30: #{daegc_forward.10} parent=0 // pred_check
    _
  $region31: #{daegc_forward.10} parent=0 // pred_check_branch
    %405 = sbr.rel (0) target = $region33
  $region32: #{daegc_forward.10} parent=0 // pred_region
    _
  $region33: #{daegc_forward.10} parent=0 // pred_fallthru
    _

// kernel: daegc_forward.11
$region0: #{daegc_forward.11}
  #allocation0 [shape = 'u32[]', space=smem, size = 0x4, offset = 0x4, fixed_abs, tag = 'smem constant byte address 0x4 - core index']
  #allocation1 [shape = 'u32[144,128]{1,0:T(1,128)}', space=vmem, size = 0x12000, scoped, tag = 'internal scratch']
  %s0 = inlined_call_operand.vmem [shape: f32[32,16], index: 0, kind: input, shape index: {}]
  %s1 = inlined_call_operand.vmem [shape: f32[16,18], index: 1, kind: input, shape index: {}]
  %s2 = inlined_call_operand.vmem [shape: bf16[32,16], index: 2, kind: output, shape index: {0}]
  %s3 = inlined_call_operand.vmem [shape: f32[32,1], index: 3, kind: output, shape index: {1}]
  %s4 = inlined_call_operand.vmem [shape: f32[1,32], index: 4, kind: output, shape index: {2}]
  %5 = xla_tuple %s2, %s3, %s4
  %s6 = sld [smem:[#allocation0]]
  $region34: #{daegc_forward.11} parent=0
    _
  %s8 = ssub.s32 1, %s6
  %s9 = scalar_select 0, %s8, %s6
  // Predicated region
  $region2: #{daegc_forward.11} parent=0 // pred_check
    _
  $region3: #{daegc_forward.11} parent=0 // pred_check_branch
    %11 = sbr.rel (0) target = $region5
  $region4: #{daegc_forward.11} parent=0 // pred_region
    _
  $region5: #{daegc_forward.11} parent=0 // pred_fallthru
    _
  // Predicated region
  $region6: #{daegc_forward.11} parent=0 // pred_check
    _
  $region7: #{daegc_forward.11} parent=0 // pred_check_branch
    %13 = sbr.rel (0) target = $region9
  $region8: #{daegc_forward.11} parent=0 // pred_region
    _
  $region9: #{daegc_forward.11} parent=0 // pred_fallthru
    _
  %v14 = vld [vmem:[%s0] sm:$0xff]
  %v15 = vld [vmem:[%s0 + $0x8] sm:$0xff]
  %v16 = vld [vmem:[%s0 + $0x10] sm:$0xff]
  %v17 = vld [vmem:[%s0 + $0x18] sm:$0xff]
  %v18 = vld [vmem:[%s1] sm:$0xff]
  %v19 = vld [vmem:[%s1 + $0x8] sm:$0xff]
  %vm20 = vcmask 130048
  %v22 = vsel %vm20, %v14, 0
  %v25 = vsel %vm20, %v15, 0
  %v28 = vsel %vm20, %v16, 0
  %v31 = vsel %vm20, %v17, 0
  %33 = vmatprep.subr.mxu0 0.0
  %34 = vmatpush1.msra.mxu0 %v18
  %35 = vmatprep.subr.mxu0 0.0
  %36 = vmatpush1.msra.mxu0 %v19
  %37 = vmatprep.subr.mxu0 0.0
  %38 = vmatpush1.msra.mxu0 0.0
  %39 = vmatprep.subr.mxu0 0.0
  %40 = vmatpush1.msra.mxu0 0.0
  %41 = vmatprep.subr.mxu0 0.0
  %42 = vmatpush1.msra.mxu0 0.0
  %43 = vmatprep.subr.mxu0 0.0
  %44 = vmatpush1.msra.mxu0 0.0
  %45 = vmatprep.subr.mxu0 0.0
  %46 = vmatpush1.msra.mxu0 0.0
  %47 = vmatprep.subr.mxu0 0.0
  %48 = vmatpush1.msra.mxu0 0.0
  %49 = vmatprep.subr.mxu0 0.0
  %50 = vmatpush1.msra.mxu0 0.0
  %51 = vmatprep.subr.mxu0 0.0
  %52 = vmatpush1.msra.mxu0 0.0
  %53 = vmatprep.subr.mxu0 0.0
  %54 = vmatpush1.msra.mxu0 0.0
  %55 = vmatprep.subr.mxu0 0.0
  %56 = vmatpush1.msra.mxu0 0.0
  %57 = vmatprep.subr.mxu0 0.0
  %58 = vmatpush1.msra.mxu0 0.0
  %59 = vmatprep.subr.mxu0 0.0
  %60 = vmatpush1.msra.mxu0 0.0
  %61 = vmatprep.subr.mxu0 0.0
  %62 = vmatpush1.msra.mxu0 0.0
  %63 = vmatprep.subr.mxu0 0.0
  %64 = vmatpush1.msra.mxu0 0.0
  %65 = vmatprep.subr.mxu0 0.0
  %66 = vmatpush1.msra.mxu0 0.0
  %67 = vmatprep.subr.mxu0 0.0
  %68 = vmatpush1.msra.mxu0 0.0
  %69 = vmatprep.subr.mxu0 0.0
  %70 = vmatpush1.msra.mxu0 0.0
  %71 = vmatprep.subr.mxu0 0.0
  %72 = vmatpush1.msra.mxu0 0.0
  %73 = vmatprep.subr.mxu0 0.0
  %74 = vmatpush1.msra.mxu0 0.0
  %75 = vmatprep.subr.mxu0 0.0
  %76 = vmatpush1.msra.mxu0 0.0
  %77 = vmatprep.subr.mxu0 0.0
  %78 = vmatpush1.msra.mxu0 0.0
  %79 = vmatprep.subr.mxu0 0.0
  %80 = vmatpush1.msra.mxu0 0.0
  %81 = vmatprep.subr.mxu0 0.0
  %82 = vmatpush1.msra.mxu0 0.0
  %83 = vmatprep.subr.mxu0 0.0
  %84 = vmatpush1.msra.mxu0 0.0
  %85 = vmatprep.subr.mxu0 0.0
  %86 = vmatpush1.msra.mxu0 0.0
  %87 = vmatprep.subr.mxu0 0.0
  %88 = vmatpush1.msra.mxu0 0.0
  %89 = vmatprep.subr.mxu0 0.0
  %90 = vmatpush1.msra.mxu0 0.0
  %91 = vmatprep.subr.mxu0 0.0
  %92 = vmatpush1.msra.mxu0 0.0
  %93 = vmatprep.subr.mxu0 0.0
  %94 = vmatpush1.msra.mxu0 0.0
  %95 = vmatprep.subr.mxu0 0.0
  %96 = vmatpush1.msra.mxu0 0.0
  %97 = vmatprep.mubr.f32.mxu0 0.0
  %98 = vmatmul.mubr.f32.gmra.mrb[0].mxu0 %v22
  %v99 = vpop.f32.mrb[0].mxu0
  %v100 = vadd.f32 0.0, %v99
  %v101 = vpop.f32.mrb[0].mxu0
  %102 = vmatprep.mubr.f32.mxu0 0.0
  %103 = vmatmul.mubr.f32.gmra.mrb[0].mxu0 %v25
  %v104 = vpop.f32.mrb[0].mxu0
  %v105 = vadd.f32 0.0, %v104
  %v106 = vpop.f32.mrb[0].mxu0
  %107 = vmatprep.mubr.f32.mxu0 0.0
  %108 = vmatmul.mubr.f32.gmra.mrb[0].mxu0 %v28
  %v109 = vpop.f32.mrb[0].mxu0
  %v110 = vadd.f32 0.0, %v109
  %v111 = vpop.f32.mrb[0].mxu0
  %112 = vmatprep.mubr.f32.mxu0 0.0
  %113 = vmatmul.mubr.f32.gmra.mrb[0].mxu0 %v31
  %v114 = vpop.f32.mrb[0].mxu0
  %v115 = vadd.f32 0.0, %v114
  %v116 = vpop.f32.mrb[0].mxu0
  %117 = vdwg.mxu0
  %v118 = vpack.c.bf16 %v105, %v100
  %v119 = vpack.c.bf16 %v115, %v110
  %v122 = vunpack.c.l.b16 %v118
  %v123 = vunpack.c.h.b16 %v118
  %v124 = vunpack.c.l.b16 %v119
  %v125 = vunpack.c.h.b16 %v119
  %v126 = vpack.c.b16 %v122, %v122
  %v127 = vpack.c.b16 %v123, %v123
  %v128 = vpack.c.b16 %v124, %v124
  %v129 = vpack.c.b16 %v125, %v125
  %vm134 = vcmask 125952
  %135 = vst.msk [vmem:[%s2] sm:$0xf] %vm134, %v126
  %136 = vst.msk [vmem:[%s2 + $0x4] sm:$0xf] %vm134, %v127
  %137 = vst.msk [vmem:[%s2 + $0x8] sm:$0xf] %vm134, %v128
  %138 = vst.msk [vmem:[%s2 + $0xc] sm:$0xf] %vm134, %v129
  %143 = vrot.lane.b32.xlu0 %v100, 112
  %v144 = vpop.permute.xlu0 %143
  %145 = vrot.lane.b32.xlu0 %v105, 112
  %v146 = vpop.permute.xlu0 %145
  %147 = vrot.lane.b32.xlu0 %v110, 112
  %v148 = vpop.permute.xlu0 %147
  %149 = vrot.lane.b32.xlu0 %v115, 112
  %v150 = vpop.permute.xlu0 %149
  %vm155 = vcmask 7168
  %156 = vst.msk [vmem:[%s3] sm:$0xff] %vm155, %v144
  %157 = vst.msk [vmem:[%s3 + $0x8] sm:$0xff] %vm155, %v146
  %158 = vst.msk [vmem:[%s3 + $0x10] sm:$0xff] %vm155, %v148
  %159 = vst.msk [vmem:[%s3 + $0x18] sm:$0xff] %vm155, %v150
  %160 = vrot.lane.b32.xlu0 %v100, 111
  %v161 = vpop.permute.xlu0 %160
  %162 = vrot.lane.b32.xlu0 %v105, 111
  %v163 = vpop.permute.xlu0 %162
  %164 = vrot.lane.b32.xlu0 %v110, 111
  %v165 = vpop.permute.xlu0 %164
  %166 = vrot.lane.b32.xlu0 %v115, 111
  %v167 = vpop.permute.xlu0 %166
  %172 = vxpose.xlu0.b32.start [1/16] %v161, 128
  %173 = vxpose.xlu0.b32.cont [2/16] %v163, 128
  %174 = vxpose.xlu0.b32.cont [3/16] %v165, 128
  %175 = vxpose.xlu0.b32.cont [4/16] %v167, 128
  %176 = vxpose.xlu0.b32.cont [5/16] 0.0, 128
  %177 = vxpose.xlu0.b32.cont [6/16] 0.0, 128
  %178 = vxpose.xlu0.b32.cont [7/16] 0.0, 128
  %179 = vxpose.xlu0.b32.cont [8/16] 0.0, 128
  %180 = vxpose.xlu0.b32.cont [9/16] 0.0, 128
  %181 = vxpose.xlu0.b32.cont [10/16] 0.0, 128
  %182 = vxpose.xlu0.b32.cont [11/16] 0.0, 128
  %183 = vxpose.xlu0.b32.cont [12/16] 0.0, 128
  %184 = vxpose.xlu0.b32.cont [13/16] 0.0, 128
  %185 = vxpose.xlu0.b32.cont [14/16] 0.0, 128
  %186 = vxpose.xlu0.b32.cont [15/16] 0.0, 128
  %187 = vxpose.xlu0.b32.end [16/16] 0.0, 128
  %v188 = vpop.trf.xlu0
  %v189 = vpop.trf.xlu0
  %v190 = vpop.trf.xlu0
  %v191 = vpop.trf.xlu0
  %v192 = vpop.trf.xlu0
  %v193 = vpop.trf.xlu0
  %v194 = vpop.trf.xlu0
  %v195 = vpop.trf.xlu0
  %v196 = vpop.trf.xlu0
  %v197 = vpop.trf.xlu0
  %v198 = vpop.trf.xlu0
  %v199 = vpop.trf.xlu0
  %v200 = vpop.trf.xlu0
  %v201 = vpop.trf.xlu0
  %v202 = vpop.trf.xlu0
  %v203 = vpop.trf.xlu0
  %vm204 = vcmask 253952
  %205 = vst.msk [vmem:[%s4] sm:$0x1] %vm204, %v188
  // Predicated region
  $region10: #{daegc_forward.11} parent=0 // pred_check
    _
  $region11: #{daegc_forward.11} parent=0 // pred_check_branch
    %207 = sbr.rel (0) target = $region13
  $region12: #{daegc_forward.11} parent=0 // pred_region
    _
  $region13: #{daegc_forward.11} parent=0 // pred_fallthru
    _
  // Predicated region
  $region14: #{daegc_forward.11} parent=0 // pred_check
    _
  $region15: #{daegc_forward.11} parent=0 // pred_check_branch
    %209 = sbr.rel (0) target = $region17
  $region16: #{daegc_forward.11} parent=0 // pred_region
    _
  $region17: #{daegc_forward.11} parent=0 // pred_fallthru
    _
  // Predicated region
  $region18: #{daegc_forward.11} parent=0 // pred_check
    _
  $region19: #{daegc_forward.11} parent=0 // pred_check_branch
    %211 = sbr.rel (0) target = $region21
  $region20: #{daegc_forward.11} parent=0 // pred_region
    _
  $region21: #{daegc_forward.11} parent=0 // pred_fallthru
    _
  // Predicated region
  $region22: #{daegc_forward.11} parent=0 // pred_check
    _
  $region23: #{daegc_forward.11} parent=0 // pred_check_branch
    %213 = sbr.rel (0) target = $region25
  $region24: #{daegc_forward.11} parent=0 // pred_region
    _
  $region25: #{daegc_forward.11} parent=0 // pred_fallthru
    _
  // Predicated region
  $region26: #{daegc_forward.11} parent=0 // pred_check
    _
  $region27: #{daegc_forward.11} parent=0 // pred_check_branch
    %215 = sbr.rel (0) target = $region29
  $region28: #{daegc_forward.11} parent=0 // pred_region
    _
  $region29: #{daegc_forward.11} parent=0 // pred_fallthru
    _
  // Predicated region
  $region30: #{daegc_forward.11} parent=0 // pred_check
    _
  $region31: #{daegc_forward.11} parent=0 // pred_check_branch
    %217 = sbr.rel (0) target = $region33
  $region32: #{daegc_forward.11} parent=0 // pred_region
    _
  $region33: #{daegc_forward.11} parent=0 // pred_fallthru
    _

// kernel: daegc_forward.13
$region0: #{daegc_forward.13}
  #allocation0 [shape = 'u32[]', space=smem, size = 0x4, offset = 0x4, fixed_abs, tag = 'smem constant byte address 0x4 - core index']
  #allocation1 [shape = 'u32[144,128]{1,0:T(1,128)}', space=vmem, size = 0x12000, scoped, tag = 'internal scratch']
  %s0 = inlined_call_operand.vmem [shape: f32[32,16], index: 0, kind: input, shape index: {}, may-alias: {0,1}]
  %s1 = inlined_call_operand.vmem [shape: f32[32,16], index: 1, kind: input, shape index: {}, may-alias: {0,1}]
  %s2 = inlined_call_operand.vmem [shape: f32[4,16], index: 2, kind: input, shape index: {}]
  %s3 = inlined_call_operand.hbm [shape: f32[32,32], index: 3, kind: output, shape index: {0}]
  %s4 = inlined_call_operand.vmem [shape: f32[32,4], index: 4, kind: output, shape index: {1}]
  %5 = xla_tuple %s3, %s4
  %s6 = sld [smem:[#allocation0]]
  $region34: #{daegc_forward.13} parent=0
    _
  %s8 = ssub.s32 1, %s6
  %s9 = scalar_select 0, %s8, %s6
  $region1: #{daegc_forward.13} parent=0
    #allocation2 [shape = 'u8[16384]{0}', space=vmem, size = 0x4000, scoped, tag = 'output window, operand 0, single buffered']
    #allocation3 [shape = 's32[1]{0}', space=sflag, size = 0x4, scoped, tag = 'scoped memory for daegc_forward.13']
    %10 = vsyncpa [#allocation3], 0
    // Predicated region
    $region2: #{daegc_forward.13} parent=1 // pred_check
      _
    $region3: #{daegc_forward.13} parent=1 // pred_check_branch
      %12 = sbr.rel (0) target = $region5
    $region4: #{daegc_forward.13} parent=1 // pred_region
      _
    $region5: #{daegc_forward.13} parent=1 // pred_fallthru
      _
    // Predicated region
    $region6: #{daegc_forward.13} parent=1 // pred_check
      _
    $region7: #{daegc_forward.13} parent=1 // pred_check_branch
      %14 = sbr.rel (0) target = $region9
    $region8: #{daegc_forward.13} parent=1 // pred_region
      _
    $region9: #{daegc_forward.13} parent=1 // pred_fallthru
      _
    // Predicated region
    $region10: #{daegc_forward.13} parent=1 // pred_check
      _
    $region11: #{daegc_forward.13} parent=1 // pred_check_branch
      %16 = sbr.rel (0) target = $region13
    $region12: #{daegc_forward.13} parent=1 // pred_region
      _
    $region13: #{daegc_forward.13} parent=1 // pred_fallthru
      _
    %v18 = vld [vmem:[%s0] sm:$0xff]
    %v19 = vld [vmem:[%s0 + $0x8] sm:$0xff]
    %v20 = vld [vmem:[%s0 + $0x10] sm:$0xff]
    %v21 = vld [vmem:[%s0 + $0x18] sm:$0xff]
    %v22 = vpack.c.bf16 %v19, %v18
    %v23 = vpack.c.bf16 %v21, %v20
    %v24 = vld [vmem:[%s1] sm:$0xff]
    %v25 = vld [vmem:[%s1 + $0x8] sm:$0xff]
    %v26 = vld [vmem:[%s1 + $0x10] sm:$0xff]
    %v27 = vld [vmem:[%s1 + $0x18] sm:$0xff]
    %v28 = vpack.c.bf16 %v25, %v24
    %v29 = vpack.c.bf16 %v27, %v26
    %vm30 = vcmask 130048
    %v32 = vsel %vm30, %v22, 0
    %v35 = vsel %vm30, %v23, 0
    %v38 = vsel %vm30, %v28, 0
    %v41 = vsel %vm30, %v29, 0
    %43 = vmatprep.subr.bf16.mxu0 0
    %44 = vmatpush1.bf16.xpose.msra.mxu0 %v38
    %45 = vmatprep.subr.bf16.mxu0 0
    %46 = vmatpush1.bf16.xpose.msra.mxu0 %v41
    %47 = vmatprep.subr.bf16.mxu0 0
    %48 = vmatpush1.bf16.xpose.msra.mxu0 0
    %49 = vmatprep.subr.bf16.mxu0 0
    %50 = vmatpush1.bf16.xpose.msra.mxu0 0
    %51 = vmatprep.subr.bf16.mxu0 0
    %52 = vmatpush1.bf16.xpose.msra.mxu0 0
    %53 = vmatprep.subr.bf16.mxu0 0
    %54 = vmatpush1.bf16.xpose.msra.mxu0 0
    %55 = vmatprep.subr.bf16.mxu0 0
    %56 = vmatpush1.bf16.xpose.msra.mxu0 0
    %57 = vmatprep.subr.bf16.mxu0 0
    %58 = vmatpush1.bf16.xpose.msra.mxu0 0
    %59 = vmatprep.subr.bf16.mxu0 0
    %60 = vmatpush1.bf16.xpose.msra.mxu0 0
    %61 = vmatprep.subr.bf16.mxu0 0
    %62 = vmatpush1.bf16.xpose.msra.mxu0 0
    %63 = vmatprep.subr.bf16.mxu0 0
    %64 = vmatpush1.bf16.xpose.msra.mxu0 0
    %65 = vmatprep.subr.bf16.mxu0 0
    %66 = vmatpush1.bf16.xpose.msra.mxu0 0
    %67 = vmatprep.subr.bf16.mxu0 0
    %68 = vmatpush1.bf16.xpose.msra.mxu0 0
    %69 = vmatprep.subr.bf16.mxu0 0
    %70 = vmatpush1.bf16.xpose.msra.mxu0 0
    %71 = vmatprep.subr.bf16.mxu0 0
    %72 = vmatpush1.bf16.xpose.msra.mxu0 0
    %73 = vmatprep.subr.bf16.mxu0 0
    %74 = vmatpush1.bf16.xpose.msra.mxu0 0
    %75 = vmatprep.mubr.bf16.mxu0 0
    %76 = vmatmul.mubr.bf16.gmra.mrb[0].mxu0 %v32
    %v77 = vpop.f32.mrb[0].mxu0
    %v78 = vadd.f32 0.0, %v77
    %v79 = vpop.f32.mrb[0].mxu0
    %v80 = vpop.f32.mrb[0].mxu0
    %v81 = vadd.f32 0.0, %v80
    %v82 = vpop.f32.mrb[0].mxu0
    %83 = vmatprep.mubr.bf16.mxu0 0
    %84 = vmatmul.mubr.bf16.gmra.mrb[0].mxu0 %v35
    %v85 = vpop.f32.mrb[0].mxu0
    %v86 = vadd.f32 0.0, %v85
    %v87 = vpop.f32.mrb[0].mxu0
    %v88 = vpop.f32.mrb[0].mxu0
    %v89 = vadd.f32 0.0, %v88
    %v90 = vpop.f32.mrb[0].mxu0
    %91 = vdwg.mxu0
    %v92 = vmul.f32 %v78, 0.5
    %v93 = vmul.f32 %v81, 0.5
    %v94 = vmul.f32 %v86, 0.5
    %v95 = vmul.f32 %v89, 0.5
    %v96 = vtanh.pop %v92
    %v97 = vtanh.pop %v93
    %v98 = vtanh.pop %v94
    %v99 = vtanh.pop %v95
    %v100 = vmul.f32 %v96, 0.5
    %v101 = vmul.f32 %v97, 0.5
    %v102 = vmul.f32 %v98, 0.5
    %v103 = vmul.f32 %v99, 0.5
    %v104 = vadd.f32 %v100, 0.5
    %v105 = vadd.f32 %v101, 0.5
    %v106 = vadd.f32 %v102, 0.5
    %v107 = vadd.f32 %v103, 0.5
    %vm108 = vcmask 261120
    %109 = vst.msk [vmem:[#allocation2] sm:$0xff] %vm108, %v104
    %110 = vst.msk [vmem:[#allocation2 + $0x8] sm:$0xff] %vm108, %v105
    %111 = vst.msk [vmem:[#allocation2 + $0x10] sm:$0xff] %vm108, %v106
    %112 = vst.msk [vmem:[#allocation2 + $0x18] sm:$0xff] %vm108, %v107
    %p113 = scmp.eq.s32.totalorder 0, 0
    // Predicated region
    $region14: #{daegc_forward.13} parent=1 // pred_check
      %p114 = pneg %p113
    $region15: #{daegc_forward.13} parent=1 // pred_check_branch
      %116 = sbr.rel (%p114) target = $region17
    $region16: #{daegc_forward.13} parent=1 // pred_region
      %v117 = vld [vmem:[%s2] sm:$0xf]
      %v119 = vsel %vm30, %v18, 0
      %v122 = vsel %vm30, %v19, 0
      %v125 = vsel %vm30, %v20, 0
      %v128 = vsel %vm30, %v21, 0
      %v131 = vsel %vm30, %v117, 0
      %133 = vmatprep.subr.mxu0 0.0
      %134 = vmatpush1.xpose.msra.mxu0 %v131
      %135 = vmatprep.subr.mxu0 0.0
      %136 = vmatpush1.xpose.msra.mxu0 0.0
      %137 = vmatprep.subr.mxu0 0.0
      %138 = vmatpush1.xpose.msra.mxu0 0.0
      %139 = vmatprep.subr.mxu0 0.0
      %140 = vmatpush1.xpose.msra.mxu0 0.0
      %141 = vmatprep.subr.mxu0 0.0
      %142 = vmatpush1.xpose.msra.mxu0 0.0
      %143 = vmatprep.subr.mxu0 0.0
      %144 = vmatpush1.xpose.msra.mxu0 0.0
      %145 = vmatprep.subr.mxu0 0.0
      %146 = vmatpush1.xpose.msra.mxu0 0.0
      %147 = vmatprep.subr.mxu0 0.0
      %148 = vmatpush1.xpose.msra.mxu0 0.0
      %149 = vmatprep.subr.mxu0 0.0
      %150 = vmatpush1.xpose.msra.mxu0 0.0
      %151 = vmatprep.subr.mxu0 0.0
      %152 = vmatpush1.xpose.msra.mxu0 0.0
      %153 = vmatprep.subr.mxu0 0.0
      %154 = vmatpush1.xpose.msra.mxu0 0.0
      %155 = vmatprep.subr.mxu0 0.0
      %156 = vmatpush1.xpose.msra.mxu0 0.0
      %157 = vmatprep.subr.mxu0 0.0
      %158 = vmatpush1.xpose.msra.mxu0 0.0
      %159 = vmatprep.subr.mxu0 0.0
      %160 = vmatpush1.xpose.msra.mxu0 0.0
      %161 = vmatprep.subr.mxu0 0.0
      %162 = vmatpush1.xpose.msra.mxu0 0.0
      %163 = vmatprep.subr.mxu0 0.0
      %164 = vmatpush1.xpose.msra.mxu0 0.0
      %165 = vmatprep.subr.mxu0 0.0
      %166 = vmatpush1.xpose.msra.mxu0 0.0
      %167 = vmatprep.subr.mxu0 0.0
      %168 = vmatpush1.xpose.msra.mxu0 0.0
      %169 = vmatprep.subr.mxu0 0.0
      %170 = vmatpush1.xpose.msra.mxu0 0.0
      %171 = vmatprep.subr.mxu0 0.0
      %172 = vmatpush1.xpose.msra.mxu0 0.0
      %173 = vmatprep.subr.mxu0 0.0
      %174 = vmatpush1.xpose.msra.mxu0 0.0
      %175 = vmatprep.subr.mxu0 0.0
      %176 = vmatpush1.xpose.msra.mxu0 0.0
      %177 = vmatprep.subr.mxu0 0.0
      %178 = vmatpush1.xpose.msra.mxu0 0.0
      %179 = vmatprep.subr.mxu0 0.0
      %180 = vmatpush1.xpose.msra.mxu0 0.0
      %181 = vmatprep.subr.mxu0 0.0
      %182 = vmatpush1.xpose.msra.mxu0 0.0
      %183 = vmatprep.subr.mxu0 0.0
      %184 = vmatpush1.xpose.msra.mxu0 0.0
      %185 = vmatprep.subr.mxu0 0.0
      %186 = vmatpush1.xpose.msra.mxu0 0.0
      %187 = vmatprep.subr.mxu0 0.0
      %188 = vmatpush1.xpose.msra.mxu0 0.0
      %189 = vmatprep.subr.mxu0 0.0
      %190 = vmatpush1.xpose.msra.mxu0 0.0
      %191 = vmatprep.subr.mxu0 0.0
      %192 = vmatpush1.xpose.msra.mxu0 0.0
      %193 = vmatprep.subr.mxu0 0.0
      %194 = vmatpush1.xpose.msra.mxu0 0.0
      %195 = vmatprep.subr.mxu0 0.0
      %196 = vmatpush1.xpose.msra.mxu0 0.0
      %197 = vmatprep.mubr.f32.mxu0 0.0
      %198 = vmatmul.mubr.f32.gmra.mrb[0].mxu0 %v119
      %v199 = vpop.f32.mrb[0].mxu0
      %v200 = vadd.f32 0.0, %v199
      %v201 = vpop.f32.mrb[0].mxu0
      %202 = vmatprep.mubr.f32.mxu0 0.0
      %203 = vmatmul.mubr.f32.gmra.mrb[0].mxu0 %v122
      %v204 = vpop.f32.mrb[0].mxu0
      %v205 = vadd.f32 0.0, %v204
      %v206 = vpop.f32.mrb[0].mxu0
      %207 = vmatprep.mubr.f32.mxu0 0.0
      %208 = vmatmul.mubr.f32.gmra.mrb[0].mxu0 %v125
      %v209 = vpop.f32.mrb[0].mxu0
      %v210 = vadd.f32 0.0, %v209
      %v211 = vpop.f32.mrb[0].mxu0
      %212 = vmatprep.mubr.f32.mxu0 0.0
      %213 = vmatmul.mubr.f32.gmra.mrb[0].mxu0 %v128
      %v214 = vpop.f32.mrb[0].mxu0
      %v215 = vadd.f32 0.0, %v214
      %v216 = vpop.f32.mrb[0].mxu0
      %217 = vdwg.mxu0
      %v218 = vmul.f32 %v18, %v18
      %v219 = vmul.f32 %v19, %v19
      %v220 = vmul.f32 %v20, %v20
      %v221 = vmul.f32 %v21, %v21
      %v222 = vsel %vm30, %v218, 0.0
      %223 = vadd.xlane.f32.xlu0 %v222
      %v224 = vpop.xlane.xlu0 %223
      %v225 = vsel %vm30, %v219, 0.0
      %226 = vadd.xlane.f32.xlu0 %v225
      %v227 = vpop.xlane.xlu0 %226
      %v228 = vsel %vm30, %v220, 0.0
      %229 = vadd.xlane.f32.xlu0 %v228
      %v230 = vpop.xlane.xlu0 %229
      %v231 = vsel %vm30, %v221, 0.0
      %232 = vadd.xlane.f32.xlu0 %v231
      %v233 = vpop.xlane.xlu0 %232
      %v234 = vmul.f32 %v117, %v117
      %vm235 = vcmask 125952
      %v236 = vsel %vm235, %v234, 0.0
      %237 = vadd.xlane.f32.xlu0 %v236
      %v238 = vpop.xlane.xlu0 %237
      %239 = vxpose.xlu0.b32.start [1/16] %v238, 128
      %240 = vxpose.xlu0.b32.cont [2/16] 0.0, 128
      %241 = vxpose.xlu0.b32.cont [3/16] 0.0, 128
      %242 = vxpose.xlu0.b32.cont [4/16] 0.0, 128
      %243 = vxpose.xlu0.b32.cont [5/16] 0.0, 128
      %244 = vxpose.xlu0.b32.cont [6/16] 0.0, 128
      %245 = vxpose.xlu0.b32.cont [7/16] 0.0, 128
      %246 = vxpose.xlu0.b32.cont [8/16] 0.0, 128
      %247 = vxpose.xlu0.b32.cont [9/16] 0.0, 128
      %248 = vxpose.xlu0.b32.cont [10/16] 0.0, 128
      %249 = vxpose.xlu0.b32.cont [11/16] 0.0, 128
      %250 = vxpose.xlu0.b32.cont [12/16] 0.0, 128
      %251 = vxpose.xlu0.b32.cont [13/16] 0.0, 128
      %252 = vxpose.xlu0.b32.cont [14/16] 0.0, 128
      %253 = vxpose.xlu0.b32.cont [15/16] 0.0, 128
      %254 = vxpose.xlu0.b32.end [16/16] 0.0, 128
      %v255 = vpop.trf.xlu0
      %v256 = vpop.trf.xlu0
      %v257 = vpop.trf.xlu0
      %v258 = vpop.trf.xlu0
      %v259 = vpop.trf.xlu0
      %v260 = vpop.trf.xlu0
      %v261 = vpop.trf.xlu0
      %v262 = vpop.trf.xlu0
      %v263 = vpop.trf.xlu0
      %v264 = vpop.trf.xlu0
      %v265 = vpop.trf.xlu0
      %v266 = vpop.trf.xlu0
      %v267 = vpop.trf.xlu0
      %v268 = vpop.trf.xlu0
      %v269 = vpop.trf.xlu0
      %v270 = vpop.trf.xlu0
      %v271 = vlaneseq
      %v272 = vshrl.u32 %v271, 7
      %v273 = vsub.s32 0, %v272
      %v274 = vrot.slane %v255, %v273
      %v275 = vadd.f32 %v224, %v274
      %v276 = vadd.f32 %v227, %v274
      %v277 = vadd.f32 %v230, %v274
      %v278 = vadd.f32 %v233, %v274
      %v279 = vmul.f32 %v200, 2.0
      %v280 = vmul.f32 %v205, 2.0
      %v281 = vmul.f32 %v210, 2.0
      %v282 = vmul.f32 %v215, 2.0
      %v283 = vsub.f32 %v275, %v279
      %v284 = vsub.f32 %v276, %v280
      %v285 = vsub.f32 %v277, %v281
      %v286 = vsub.f32 %v278, %v282
      %v287 = vmax.f32 %v283, 0.0
      %v288 = vmax.f32 %v284, 0.0
      %v289 = vmax.f32 %v285, 0.0
      %v290 = vmax.f32 %v286, 0.0
      %v291 = vadd.f32 %v287, 1.0
      %v292 = vadd.f32 %v288, 1.0
      %v293 = vadd.f32 %v289, 1.0
      %v294 = vadd.f32 %v290, 1.0
      %v295 = vrcp.pop %v291
      %v296 = vrcp.pop %v292
      %v297 = vrcp.pop %v293
      %v298 = vrcp.pop %v294
      %v299 = vrsqrt.pop %v295
      %v300 = vmul.f32 %v295, %v299
      %vm301 = vcmp.eq.f32.partialorder %v295, inf
      %v302 = vsel %vm301, %v295, %v300
      %vm303 = vcmp.eq.f32.partialorder %v295, 0.0
      %v304 = vand.u32 %v295, 2147483648
      %v305 = vsel %vm303, %v304, %v302
      %v306 = vrsqrt.pop %v296
      %v307 = vmul.f32 %v296, %v306
      %vm308 = vcmp.eq.f32.partialorder %v296, inf
      %v309 = vsel %vm308, %v296, %v307
      %vm310 = vcmp.eq.f32.partialorder %v296, 0.0
      %v311 = vand.u32 %v296, 2147483648
      %v312 = vsel %vm310, %v311, %v309
      %v313 = vrsqrt.pop %v297
      %v314 = vmul.f32 %v297, %v313
      %vm315 = vcmp.eq.f32.partialorder %v297, inf
      %v316 = vsel %vm315, %v297, %v314
      %vm317 = vcmp.eq.f32.partialorder %v297, 0.0
      %v318 = vand.u32 %v297, 2147483648
      %v319 = vsel %vm317, %v318, %v316
      %v320 = vrsqrt.pop %v298
      %v321 = vmul.f32 %v298, %v320
      %vm322 = vcmp.eq.f32.partialorder %v298, inf
      %v323 = vsel %vm322, %v298, %v321
      %vm324 = vcmp.eq.f32.partialorder %v298, 0.0
      %v325 = vand.u32 %v298, 2147483648
      %v326 = vsel %vm324, %v325, %v323
      %v327 = vmul.f32 %v295, %v305
      %v328 = vmul.f32 %v296, %v312
      %v329 = vmul.f32 %v297, %v319
      %v330 = vmul.f32 %v298, %v326
      %vm331 = vcmask 31744
      %v332 = vsel %vm331, %v327, 0.0
      %333 = vadd.xlane.f32.xlu0 %v332
      %v334 = vpop.xlane.xlu0 %333
      %v335 = vsel %vm331, %v328, 0.0
      %336 = vadd.xlane.f32.xlu0 %v335
      %v337 = vpop.xlane.xlu0 %336
      %v338 = vsel %vm331, %v329, 0.0
      %339 = vadd.xlane.f32.xlu0 %v338
      %v340 = vpop.xlane.xlu0 %339
      %v341 = vsel %vm331, %v330, 0.0
      %342 = vadd.xlane.f32.xlu0 %v341
      %v343 = vpop.xlane.xlu0 %342
      %v344 = vrcp.pop %v334
      %v345 = vrcp.pop %v337
      %v346 = vrcp.pop %v340
      %v347 = vrcp.pop %v343
      %v348 = vmul.f32 %v327, %v344
      %v349 = vmul.f32 %v328, %v345
      %v350 = vmul.f32 %v329, %v346
      %v351 = vmul.f32 %v330, %v347
      %352 = vst.msk [vmem:[%s4] sm:$0xff] %vm331, %v348
      %353 = vst.msk [vmem:[%s4 + $0x8] sm:$0xff] %vm331, %v349
      %354 = vst.msk [vmem:[%s4 + $0x10] sm:$0xff] %vm331, %v350
      %355 = vst.msk [vmem:[%s4 + $0x18] sm:$0xff] %vm331, %v351
    $region17: #{daegc_forward.13} parent=1 // pred_fallthru
      _
    // Predicated region
    $region18: #{daegc_forward.13} parent=1 // pred_check
      _
    $region19: #{daegc_forward.13} parent=1 // pred_check_branch
      %357 = sbr.rel (0) target = $region21
    $region20: #{daegc_forward.13} parent=1 // pred_region
      %s359 = ssub.s32 512, 512
      %360 = vsyncadd [#allocation3], %s359
      %s361 = sshll.u32 [#allocation2], 4
      %s362 = int_to_ptr.vmem [resolvable:$true] %s361
      %367 = dma.vmem_to_hbm [thread:$0]  %s362, 512, %s3, [#allocation3], 128, 128, 8
    $region21: #{daegc_forward.13} parent=1 // pred_fallthru
      _
    // Predicated region
    $region22: #{daegc_forward.13} parent=1 // pred_check
      _
    $region23: #{daegc_forward.13} parent=1 // pred_check_branch
      %369 = sbr.rel (0) target = $region25
    $region24: #{daegc_forward.13} parent=1 // pred_region
      _
    $region25: #{daegc_forward.13} parent=1 // pred_fallthru
      _
    // Predicated region
    $region26: #{daegc_forward.13} parent=1 // pred_check
      _
    $region27: #{daegc_forward.13} parent=1 // pred_check_branch
      %371 = sbr.rel (0) target = $region29
    $region28: #{daegc_forward.13} parent=1 // pred_region
      %372 = dma.done [#allocation3], 512
    $region29: #{daegc_forward.13} parent=1 // pred_fallthru
      _
    // Predicated region
    $region30: #{daegc_forward.13} parent=1 // pred_check
      _
    $region31: #{daegc_forward.13} parent=1 // pred_check_branch
      %374 = sbr.rel (0) target = $region33
    $region32: #{daegc_forward.13} parent=1 // pred_region
      _
    $region33: #{daegc_forward.13} parent=1 // pred_fallthru
      _
    %375 = vsyncpa [#allocation3], 1

</llo_original>
